<compile_context>
chip_gen: v7x
topology: tpu7x:2x2x1
jax: 0.10.0
libtpu: 0.0.40
codegen_flags: <defaults>
</compile_context>

<pallas_src>
import jax
import jax.numpy as jnp
from jax.experimental import pallas as pl
from jax.experimental.pallas import tpu as pltpu

EPS = 1e-5
CP = 8  # channel count padded to one full sublane tile


def _make_residual_block_kernel(W, NHW):
    inv_nhw = 1.0 / float(NHW)
    taps = [(dy, dx) for dy in (-1, 0, 1) for dx in (-1, 0, 1)]
    # row (in the packed (8, NHW) mask input) for each non-center tap
    mask_row, r = {}, 0
    for t, (dy, dx) in enumerate(taps):
        if (dy, dx) != (0, 0):
            mask_row[t] = r
            r += 1

    def kernel(x_ref, w_ref, bn_ref, m_ref, out_ref, patch_ref):
        f32 = jnp.float32

        def conv3x3(act, w_k):
            # act: (CP, NHW).  Nine taps via XLU lane rolls (no halo-buffer
            # store/reload); border masks zero everything that wraps across
            # image boundaries.  Each tap slot is a full 8-sublane tile, so
            # every patch store is an unmasked full-tile vst.
            for t, (dy, dx) in enumerate(taps):
                off = dy * W + dx
                if off == 0:
                    tap = act
                else:
                    tap = pltpu.roll(act, shift=(-off) % NHW, axis=1)
                    mr = mask_row[t]
                    tap = tap * m_ref[mr:mr + 1, :]
                patch_ref[t * CP:(t + 1) * CP, :] = tap
            # one (CP, 9*CP) @ (9*CP, NHW) MXU contraction per conv
            return jnp.dot(w_k, patch_ref[...], preferred_element_type=f32)

        def bn_train(y, g_col, be_col):
            # training-mode BN (biased variance over N,H,W); centered second
            # pass avoids E[x^2]-E[x]^2 cancellation.
            mean = jnp.sum(y, axis=1, keepdims=True) * inv_nhw
            yc = y - mean
            var = jnp.sum(yc * yc, axis=1, keepdims=True) * inv_nhw
            scale = g_col * jax.lax.rsqrt(var + EPS)
            return yc * scale + be_col

        # Conv biases intentionally absent: BN's mean subtraction cancels them.
        out = conv3x3(x_ref[...], w_ref[0])
        out = jnp.maximum(bn_train(out, bn_ref[:, 0:1], bn_ref[:, 1:2]), 0.0)
        out = conv3x3(out, w_ref[1])
        out = bn_train(out, bn_ref[:, 2:3], bn_ref[:, 3:4])
        # reload the residual just before the add (keeps live ranges short)
        out_ref[...] = out + x_ref[...]

    return kernel


def residual_block_pallas(x_nchw, params):
    """x_nchw: (N, C, H, W) float32 -> (N, C, H, W) float32."""
    w1, b1, g1, be1, w2, b2, g2, be2 = params
    del b1, b2  # mathematically cancelled by training-mode BN mean subtraction
    N, C, H, W = x_nchw.shape
    NHW = N * H * W

    # Channel-major, sublane/lane-dense activation: (CP, NHW), rows C..CP-1 zero.
    x_cm = jnp.transpose(x_nchw, (1, 0, 2, 3)).reshape(C, NHW).astype(jnp.float32)
    x_pad = jnp.pad(x_cm, ((0, CP - C), (0, 0)))

    # im2col weights: (co, tap, ci) padded to CP on both channel axes so every
    # tap occupies a full 8-sublane slot; both convs stacked into one slab.
    def pack_w(w):
        wt = jnp.transpose(w, (0, 2, 3, 1)).reshape(C, 9, C)       # (co, tap, ci)
        wt = jnp.pad(wt, ((0, CP - C), (0, 0), (0, CP - C)))       # (CP, 9, CP)
        return wt.reshape(CP, 9 * CP).astype(jnp.float32)

    w_slab = jnp.stack([pack_w(w1), pack_w(w2)], axis=0)           # (2, CP, 9*CP)

    # BN gamma/beta packed into one (CP, 4) array: [g1, be1, g2, be2].
    def col(v):
        return jnp.pad(v.astype(jnp.float32), (0, CP - C)).reshape(CP, 1)

    bn_pack = jnp.concatenate([col(g1), col(be1), col(g2), col(be2)], axis=1)

    # Border masks (hoisted out of the kernel): f32 0/1, one row per
    # non-center tap, zeroing every tap that leaves its source image
    # (including cross-image / buffer wraparound on the flat NHW axis).
    fidx = jnp.arange(NHW)
    xcol = fidx % W
    yrow = (fidx // W) % H
    rows = []
    for dy in (-1, 0, 1):
        for dx in (-1, 0, 1):
            if dy == 0 and dx == 0:
                continue
            ok = jnp.ones((NHW,), bool)
            if dx == -1:
                ok = ok & (xcol >= 1)
            if dx == 1:
                ok = ok & (xcol <= W - 2)
            if dy == -1:
                ok = ok & (yrow >= 1)
            if dy == 1:
                ok = ok & (yrow <= H - 2)
            rows.append(ok.astype(jnp.float32))
    masks = jnp.stack(rows, axis=0)                                # (8, NHW)

    kernel = _make_residual_block_kernel(W, NHW)
    vmem = pl.BlockSpec(memory_space=pltpu.MemorySpace.VMEM)

    out_pad = pl.pallas_call(
        kernel,
        out_shape=jax.ShapeDtypeStruct((CP, NHW), jnp.float32),
        in_specs=[vmem] * 4,
        out_specs=vmem,
        scratch_shapes=[pltpu.VMEM((9 * CP, NHW), jnp.float32)],   # im2col patches
    )(x_pad, w_slab, bn_pack, masks)

    out_cm = out_pad[:C]
    return jnp.transpose(out_cm.reshape(C, N, H, W), (1, 0, 2, 3))


def residual_block_ref(x_nchw, params):
    """Pure-JAX reference matching the PyTorch forward (training-mode BN)."""
    w1, b1, g1, be1, w2, b2, g2, be2 = params

    def conv(x, w, b):
        y = jax.lax.conv_general_dilated(
            x, w, window_strides=(1, 1), padding=((1, 1), (1, 1)),
            dimension_numbers=('NCHW', 'OIHW', 'NCHW'))
        return y + b[None, :, None, None]

    def bn(y, g, be):
        mean = jnp.mean(y, axis=(0, 2, 3), keepdims=True)
        var = jnp.mean((y - mean) ** 2, axis=(0, 2, 3), keepdims=True)
        return (y - mean) / jnp.sqrt(var + EPS) * g[None, :, None, None] \
            + be[None, :, None, None]

    out = jax.nn.relu(bn(conv(x_nchw, w1, b1), g1, be1))
    out = bn(conv(out, w2, b2), g2, be2)
    return out + x_nchw


if __name__ == "__main__":
    N, C, H, W = 2, 4, 16, 16
    key = jax.random.PRNGKey(0)
    keys = jax.random.split(key, 9)

    x = jax.random.normal(keys[0], (N, C, H, W), jnp.float32)

    # Deterministic parameter init (shapes from ResidualBlock.__init__).
    w1 = jax.random.normal(keys[1], (C, C, 3, 3), jnp.float32) * 0.1
    b1 = jax.random.normal(keys[2], (C,), jnp.float32) * 0.1
    g1 = 1.0 + 0.1 * jax.random.normal(keys[3], (C,), jnp.float32)
    be1 = 0.1 * jax.random.normal(keys[4], (C,), jnp.float32)
    w2 = jax.random.normal(keys[5], (C, C, 3, 3), jnp.float32) * 0.1
    b2 = jax.random.normal(keys[6], (C,), jnp.float32) * 0.1
    g2 = 1.0 + 0.1 * jax.random.normal(keys[7], (C,), jnp.float32)
    be2 = 0.1 * jax.random.normal(keys[8], (C,), jnp.float32)
    params = (w1, b1, g1, be1, w2, b2, g2, be2)

    out = jax.block_until_ready(residual_block_pallas(x, params))
    ref = jax.block_until_ready(residual_block_ref(x, params))

    assert out.shape == (N, C, H, W)
    assert jnp.allclose(out, ref, rtol=1e-4, atol=1e-4), float(jnp.max(jnp.abs(out - ref)))
    print("KERNEL_OK")
</pallas_src>

<mosaic_0001>
module attributes {stable_mosaic.version = 11 : i64} {
  func.func @kernel(%arg0: memref<8x512xf32, #tpu.memory_space<vmem>>, %arg1: memref<2x8x72xf32, #tpu.memory_space<vmem>>, %arg2: memref<8x4xf32, #tpu.memory_space<vmem>>, %arg3: memref<8x512xf32, #tpu.memory_space<vmem>>, %arg4: memref<8x512xf32, #tpu.memory_space<vmem>>, %arg5: memref<72x512xf32, #tpu.memory_space<vmem>>) attributes {dimension_semantics = [], scalar_prefetch = 0 : i64, scratch_operands = 1 : i64, tpu.core_type = #tpu.core_type<tc>} {
    %c0 = arith.constant 0 : index
    %c0_0 = arith.constant 0 : index
    %0 = vector.load %arg0[%c0, %c0_0] : memref<8x512xf32, #tpu.memory_space<vmem>>, vector<8x512xf32>
    %c0_1 = arith.constant 0 : index
    %c0_2 = arith.constant 0 : index
    %c0_3 = arith.constant 0 : index
    %1 = vector.load %arg1[%c0_1, %c0_2, %c0_3] : memref<2x8x72xf32, #tpu.memory_space<vmem>>, vector<1x8x72xf32>
    %2 = vector.shape_cast %1 : vector<1x8x72xf32> to vector<8x72xf32>
    %c17_i32 = arith.constant 17 : i32
    %3 = tpu.dynamic_rotate %0 by %c17_i32 dim 1 : vector<8x512xf32>, i32 -> vector<8x512xf32>
    %c0_4 = arith.constant 0 : index
    %c0_5 = arith.constant 0 : index
    %4 = vector.load %arg3[%c0_4, %c0_5] : memref<8x512xf32, #tpu.memory_space<vmem>>, vector<1x512xf32>
    %5 = vector.broadcast %4 : vector<1x512xf32> to vector<8x512xf32>
    %6 = arith.mulf %3, %5 : vector<8x512xf32>
    %c0_6 = arith.constant 0 : index
    %c0_7 = arith.constant 0 : index
    %7 = vector.load %arg5[%c0_6, %c0_7] : memref<72x512xf32, #tpu.memory_space<vmem>>, vector<8x512xf32>
    tpu.vector_store %arg5[%c0_6, %c0_7], %6 {strides = array<i32>} : memref<72x512xf32, #tpu.memory_space<vmem>>, vector<8x512xf32>,
    %c16_i32 = arith.constant 16 : i32
    %8 = tpu.dynamic_rotate %0 by %c16_i32 dim 1 : vector<8x512xf32>, i32 -> vector<8x512xf32>
    %c1 = arith.constant 1 : index
    %c0_8 = arith.constant 0 : index
    %9 = vector.load %arg3[%c1, %c0_8] : memref<8x512xf32, #tpu.memory_space<vmem>>, vector<1x512xf32>
    %10 = vector.broadcast %9 : vector<1x512xf32> to vector<8x512xf32>
    %11 = arith.mulf %8, %10 : vector<8x512xf32>
    %c8 = arith.constant 8 : index
    %c0_9 = arith.constant 0 : index
    %12 = vector.load %arg5[%c8, %c0_9] : memref<72x512xf32, #tpu.memory_space<vmem>>, vector<8x512xf32>
    tpu.vector_store %arg5[%c8, %c0_9], %11 {strides = array<i32>} : memref<72x512xf32, #tpu.memory_space<vmem>>, vector<8x512xf32>,
    %c15_i32 = arith.constant 15 : i32
    %13 = tpu.dynamic_rotate %0 by %c15_i32 dim 1 : vector<8x512xf32>, i32 -> vector<8x512xf32>
    %c2 = arith.constant 2 : index
    %c0_10 = arith.constant 0 : index
    %14 = vector.load %arg3[%c2, %c0_10] : memref<8x512xf32, #tpu.memory_space<vmem>>, vector<1x512xf32>
    %15 = vector.broadcast %14 : vector<1x512xf32> to vector<8x512xf32>
    %16 = arith.mulf %13, %15 : vector<8x512xf32>
    %c16 = arith.constant 16 : index
    %c0_11 = arith.constant 0 : index
    %17 = vector.load %arg5[%c16, %c0_11] : memref<72x512xf32, #tpu.memory_space<vmem>>, vector<8x512xf32>
    tpu.vector_store %arg5[%c16, %c0_11], %16 {strides = array<i32>} : memref<72x512xf32, #tpu.memory_space<vmem>>, vector<8x512xf32>,
    %c1_i32 = arith.constant 1 : i32
    %18 = tpu.dynamic_rotate %0 by %c1_i32 dim 1 : vector<8x512xf32>, i32 -> vector<8x512xf32>
    %c3 = arith.constant 3 : index
    %c0_12 = arith.constant 0 : index
    %19 = vector.load %arg3[%c3, %c0_12] : memref<8x512xf32, #tpu.memory_space<vmem>>, vector<1x512xf32>
    %20 = vector.broadcast %19 : vector<1x512xf32> to vector<8x512xf32>
    %21 = arith.mulf %18, %20 : vector<8x512xf32>
    %c24 = arith.constant 24 : index
    %c0_13 = arith.constant 0 : index
    %22 = vector.load %arg5[%c24, %c0_13] : memref<72x512xf32, #tpu.memory_space<vmem>>, vector<8x512xf32>
    tpu.vector_store %arg5[%c24, %c0_13], %21 {strides = array<i32>} : memref<72x512xf32, #tpu.memory_space<vmem>>, vector<8x512xf32>,
    %c32 = arith.constant 32 : index
    %c0_14 = arith.constant 0 : index
    %23 = vector.load %arg5[%c32, %c0_14] : memref<72x512xf32, #tpu.memory_space<vmem>>, vector<8x512xf32>
    tpu.vector_store %arg5[%c32, %c0_14], %0 {strides = array<i32>} : memref<72x512xf32, #tpu.memory_space<vmem>>, vector<8x512xf32>,
    %c511_i32 = arith.constant 511 : i32
    %24 = tpu.dynamic_rotate %0 by %c511_i32 dim 1 : vector<8x512xf32>, i32 -> vector<8x512xf32>
    %c4 = arith.constant 4 : index
    %c0_15 = arith.constant 0 : index
    %25 = vector.load %arg3[%c4, %c0_15] : memref<8x512xf32, #tpu.memory_space<vmem>>, vector<1x512xf32>
    %26 = vector.broadcast %25 : vector<1x512xf32> to vector<8x512xf32>
    %27 = arith.mulf %24, %26 : vector<8x512xf32>
    %c40 = arith.constant 40 : index
    %c0_16 = arith.constant 0 : index
    %28 = vector.load %arg5[%c40, %c0_16] : memref<72x512xf32, #tpu.memory_space<vmem>>, vector<8x512xf32>
    tpu.vector_store %arg5[%c40, %c0_16], %27 {strides = array<i32>} : memref<72x512xf32, #tpu.memory_space<vmem>>, vector<8x512xf32>,
    %c497_i32 = arith.constant 497 : i32
    %29 = tpu.dynamic_rotate %0 by %c497_i32 dim 1 : vector<8x512xf32>, i32 -> vector<8x512xf32>
    %c5 = arith.constant 5 : index
    %c0_17 = arith.constant 0 : index
    %30 = vector.load %arg3[%c5, %c0_17] : memref<8x512xf32, #tpu.memory_space<vmem>>, vector<1x512xf32>
    %31 = vector.broadcast %30 : vector<1x512xf32> to vector<8x512xf32>
    %32 = arith.mulf %29, %31 : vector<8x512xf32>
    %c48 = arith.constant 48 : index
    %c0_18 = arith.constant 0 : index
    %33 = vector.load %arg5[%c48, %c0_18] : memref<72x512xf32, #tpu.memory_space<vmem>>, vector<8x512xf32>
    tpu.vector_store %arg5[%c48, %c0_18], %32 {strides = array<i32>} : memref<72x512xf32, #tpu.memory_space<vmem>>, vector<8x512xf32>,
    %c496_i32 = arith.constant 496 : i32
    %34 = tpu.dynamic_rotate %0 by %c496_i32 dim 1 : vector<8x512xf32>, i32 -> vector<8x512xf32>
    %c6 = arith.constant 6 : index
    %c0_19 = arith.constant 0 : index
    %35 = vector.load %arg3[%c6, %c0_19] : memref<8x512xf32, #tpu.memory_space<vmem>>, vector<1x512xf32>
    %36 = vector.broadcast %35 : vector<1x512xf32> to vector<8x512xf32>
    %37 = arith.mulf %34, %36 : vector<8x512xf32>
    %c56 = arith.constant 56 : index
    %c0_20 = arith.constant 0 : index
    %38 = vector.load %arg5[%c56, %c0_20] : memref<72x512xf32, #tpu.memory_space<vmem>>, vector<8x512xf32>
    tpu.vector_store %arg5[%c56, %c0_20], %37 {strides = array<i32>} : memref<72x512xf32, #tpu.memory_space<vmem>>, vector<8x512xf32>,
    %c495_i32 = arith.constant 495 : i32
    %39 = tpu.dynamic_rotate %0 by %c495_i32 dim 1 : vector<8x512xf32>, i32 -> vector<8x512xf32>
    %c7 = arith.constant 7 : index
    %c0_21 = arith.constant 0 : index
    %40 = vector.load %arg3[%c7, %c0_21] : memref<8x512xf32, #tpu.memory_space<vmem>>, vector<1x512xf32>
    %41 = vector.broadcast %40 : vector<1x512xf32> to vector<8x512xf32>
    %42 = arith.mulf %39, %41 : vector<8x512xf32>
    %c64 = arith.constant 64 : index
    %c0_22 = arith.constant 0 : index
    %43 = vector.load %arg5[%c64, %c0_22] : memref<72x512xf32, #tpu.memory_space<vmem>>, vector<8x512xf32>
    tpu.vector_store %arg5[%c64, %c0_22], %42 {strides = array<i32>} : memref<72x512xf32, #tpu.memory_space<vmem>>, vector<8x512xf32>,
    %c0_23 = arith.constant 0 : index
    %c0_24 = arith.constant 0 : index
    %44 = vector.load %arg5[%c0_23, %c0_24] : memref<72x512xf32, #tpu.memory_space<vmem>>, vector<72x512xf32>
    %cst = arith.constant dense<0.000000e+00> : vector<8x512xf32>
    %45 = tpu.matmul %2, %44, %cst {dimension_numbers = #tpu.dot_dimension_numbers<[1], [0], [0], [1], [0, 0, 1, 1], [], []>} : vector<8x72xf32>, vector<72x512xf32>, vector<8x512xf32> -> vector<8x512xf32>
    %c0_25 = arith.constant 0 : index
    %c0_26 = arith.constant 0 : index
    %46 = vector.load %arg2[%c0_25, %c0_26] : memref<8x4xf32, #tpu.memory_space<vmem>>, vector<8x1xf32>
    %c0_27 = arith.constant 0 : index
    %c1_28 = arith.constant 1 : index
    %47 = vector.load %arg2[%c0_27, %c1_28] : memref<8x4xf32, #tpu.memory_space<vmem>>, vector<8x1xf32>
    %cst_29 = arith.constant dense<0.000000e+00> : vector<8xf32>
    %48 = vector.multi_reduction <add>, %45, %cst_29 [1] : vector<8x512xf32> to vector<8xf32>
    %49 = vector.shape_cast %48 : vector<8xf32> to vector<8x1xf32>
    %cst_30 = arith.constant 0.001953125 : f32
    %50 = vector.broadcast %cst_30 : f32 to vector<8x1xf32>
    %51 = arith.mulf %49, %50 : vector<8x1xf32>
    %52 = vector.broadcast %51 : vector<8x1xf32> to vector<8x512xf32>
    %53 = arith.subf %45, %52 : vector<8x512xf32>
    %54 = arith.mulf %53, %53 : vector<8x512xf32>
    %cst_31 = arith.constant dense<0.000000e+00> : vector<8xf32>
    %55 = vector.multi_reduction <add>, %54, %cst_31 [1] : vector<8x512xf32> to vector<8xf32>
    %56 = vector.shape_cast %55 : vector<8xf32> to vector<8x1xf32>
    %cst_32 = arith.constant 0.001953125 : f32
    %57 = vector.broadcast %cst_32 : f32 to vector<8x1xf32>
    %58 = arith.mulf %56, %57 : vector<8x1xf32>
    %cst_33 = arith.constant 9.99999974E-6 : f32
    %59 = vector.broadcast %cst_33 : f32 to vector<8x1xf32>
    %60 = arith.addf %58, %59 : vector<8x1xf32>
    %61 = math.rsqrt %60 : vector<8x1xf32>
    %62 = arith.mulf %46, %61 : vector<8x1xf32>
    %63 = vector.broadcast %62 : vector<8x1xf32> to vector<8x512xf32>
    %64 = arith.mulf %53, %63 : vector<8x512xf32>
    %65 = vector.broadcast %47 : vector<8x1xf32> to vector<8x512xf32>
    %66 = arith.addf %64, %65 : vector<8x512xf32>
    %cst_34 = arith.constant 0.000000e+00 : f32
    %67 = vector.broadcast %cst_34 : f32 to vector<8x512xf32>
    %68 = arith.maximumf %66, %67 : vector<8x512xf32>
    %c1_35 = arith.constant 1 : index
    %c0_36 = arith.constant 0 : index
    %c0_37 = arith.constant 0 : index
    %69 = vector.load %arg1[%c1_35, %c0_36, %c0_37] : memref<2x8x72xf32, #tpu.memory_space<vmem>>, vector<1x8x72xf32>
    %70 = vector.shape_cast %69 : vector<1x8x72xf32> to vector<8x72xf32>
    %c17_i32_38 = arith.constant 17 : i32
    %71 = tpu.dynamic_rotate %68 by %c17_i32_38 dim 1 : vector<8x512xf32>, i32 -> vector<8x512xf32>
    %c0_39 = arith.constant 0 : index
    %c0_40 = arith.constant 0 : index
    %72 = vector.load %arg3[%c0_39, %c0_40] : memref<8x512xf32, #tpu.memory_space<vmem>>, vector<1x512xf32>
    %73 = vector.broadcast %72 : vector<1x512xf32> to vector<8x512xf32>
    %74 = arith.mulf %71, %73 : vector<8x512xf32>
    %c0_41 = arith.constant 0 : index
    %c0_42 = arith.constant 0 : index
    %75 = vector.load %arg5[%c0_41, %c0_42] : memref<72x512xf32, #tpu.memory_space<vmem>>, vector<8x512xf32>
    tpu.vector_store %arg5[%c0_41, %c0_42], %74 {strides = array<i32>} : memref<72x512xf32, #tpu.memory_space<vmem>>, vector<8x512xf32>,
    %c16_i32_43 = arith.constant 16 : i32
    %76 = tpu.dynamic_rotate %68 by %c16_i32_43 dim 1 : vector<8x512xf32>, i32 -> vector<8x512xf32>
    %c1_44 = arith.constant 1 : index
    %c0_45 = arith.constant 0 : index
    %77 = vector.load %arg3[%c1_44, %c0_45] : memref<8x512xf32, #tpu.memory_space<vmem>>, vector<1x512xf32>
    %78 = vector.broadcast %77 : vector<1x512xf32> to vector<8x512xf32>
    %79 = arith.mulf %76, %78 : vector<8x512xf32>
    %c8_46 = arith.constant 8 : index
    %c0_47 = arith.constant 0 : index
    %80 = vector.load %arg5[%c8_46, %c0_47] : memref<72x512xf32, #tpu.memory_space<vmem>>, vector<8x512xf32>
    tpu.vector_store %arg5[%c8_46, %c0_47], %79 {strides = array<i32>} : memref<72x512xf32, #tpu.memory_space<vmem>>, vector<8x512xf32>,
    %c15_i32_48 = arith.constant 15 : i32
    %81 = tpu.dynamic_rotate %68 by %c15_i32_48 dim 1 : vector<8x512xf32>, i32 -> vector<8x512xf32>
    %c2_49 = arith.constant 2 : index
    %c0_50 = arith.constant 0 : index
    %82 = vector.load %arg3[%c2_49, %c0_50] : memref<8x512xf32, #tpu.memory_space<vmem>>, vector<1x512xf32>
    %83 = vector.broadcast %82 : vector<1x512xf32> to vector<8x512xf32>
    %84 = arith.mulf %81, %83 : vector<8x512xf32>
    %c16_51 = arith.constant 16 : index
    %c0_52 = arith.constant 0 : index
    %85 = vector.load %arg5[%c16_51, %c0_52] : memref<72x512xf32, #tpu.memory_space<vmem>>, vector<8x512xf32>
    tpu.vector_store %arg5[%c16_51, %c0_52], %84 {strides = array<i32>} : memref<72x512xf32, #tpu.memory_space<vmem>>, vector<8x512xf32>,
    %c1_i32_53 = arith.constant 1 : i32
    %86 = tpu.dynamic_rotate %68 by %c1_i32_53 dim 1 : vector<8x512xf32>, i32 -> vector<8x512xf32>
    %c3_54 = arith.constant 3 : index
    %c0_55 = arith.constant 0 : index
    %87 = vector.load %arg3[%c3_54, %c0_55] : memref<8x512xf32, #tpu.memory_space<vmem>>, vector<1x512xf32>
    %88 = vector.broadcast %87 : vector<1x512xf32> to vector<8x512xf32>
    %89 = arith.mulf %86, %88 : vector<8x512xf32>
    %c24_56 = arith.constant 24 : index
    %c0_57 = arith.constant 0 : index
    %90 = vector.load %arg5[%c24_56, %c0_57] : memref<72x512xf32, #tpu.memory_space<vmem>>, vector<8x512xf32>
    tpu.vector_store %arg5[%c24_56, %c0_57], %89 {strides = array<i32>} : memref<72x512xf32, #tpu.memory_space<vmem>>, vector<8x512xf32>,
    %c32_58 = arith.constant 32 : index
    %c0_59 = arith.constant 0 : index
    %91 = vector.load %arg5[%c32_58, %c0_59] : memref<72x512xf32, #tpu.memory_space<vmem>>, vector<8x512xf32>
    tpu.vector_store %arg5[%c32_58, %c0_59], %68 {strides = array<i32>} : memref<72x512xf32, #tpu.memory_space<vmem>>, vector<8x512xf32>,
    %c511_i32_60 = arith.constant 511 : i32
    %92 = tpu.dynamic_rotate %68 by %c511_i32_60 dim 1 : vector<8x512xf32>, i32 -> vector<8x512xf32>
    %c4_61 = arith.constant 4 : index
    %c0_62 = arith.constant 0 : index
    %93 = vector.load %arg3[%c4_61, %c0_62] : memref<8x512xf32, #tpu.memory_space<vmem>>, vector<1x512xf32>
    %94 = vector.broadcast %93 : vector<1x512xf32> to vector<8x512xf32>
    %95 = arith.mulf %92, %94 : vector<8x512xf32>
    %c40_63 = arith.constant 40 : index
    %c0_64 = arith.constant 0 : index
    %96 = vector.load %arg5[%c40_63, %c0_64] : memref<72x512xf32, #tpu.memory_space<vmem>>, vector<8x512xf32>
    tpu.vector_store %arg5[%c40_63, %c0_64], %95 {strides = array<i32>} : memref<72x512xf32, #tpu.memory_space<vmem>>, vector<8x512xf32>,
    %c497_i32_65 = arith.constant 497 : i32
    %97 = tpu.dynamic_rotate %68 by %c497_i32_65 dim 1 : vector<8x512xf32>, i32 -> vector<8x512xf32>
    %c5_66 = arith.constant 5 : index
    %c0_67 = arith.constant 0 : index
    %98 = vector.load %arg3[%c5_66, %c0_67] : memref<8x512xf32, #tpu.memory_space<vmem>>, vector<1x512xf32>
    %99 = vector.broadcast %98 : vector<1x512xf32> to vector<8x512xf32>
    %100 = arith.mulf %97, %99 : vector<8x512xf32>
    %c48_68 = arith.constant 48 : index
    %c0_69 = arith.constant 0 : index
    %101 = vector.load %arg5[%c48_68, %c0_69] : memref<72x512xf32, #tpu.memory_space<vmem>>, vector<8x512xf32>
    tpu.vector_store %arg5[%c48_68, %c0_69], %100 {strides = array<i32>} : memref<72x512xf32, #tpu.memory_space<vmem>>, vector<8x512xf32>,
    %c496_i32_70 = arith.constant 496 : i32
    %102 = tpu.dynamic_rotate %68 by %c496_i32_70 dim 1 : vector<8x512xf32>, i32 -> vector<8x512xf32>
    %c6_71 = arith.constant 6 : index
    %c0_72 = arith.constant 0 : index
    %103 = vector.load %arg3[%c6_71, %c0_72] : memref<8x512xf32, #tpu.memory_space<vmem>>, vector<1x512xf32>
    %104 = vector.broadcast %103 : vector<1x512xf32> to vector<8x512xf32>
    %105 = arith.mulf %102, %104 : vector<8x512xf32>
    %c56_73 = arith.constant 56 : index
    %c0_74 = arith.constant 0 : index
    %106 = vector.load %arg5[%c56_73, %c0_74] : memref<72x512xf32, #tpu.memory_space<vmem>>, vector<8x512xf32>
    tpu.vector_store %arg5[%c56_73, %c0_74], %105 {strides = array<i32>} : memref<72x512xf32, #tpu.memory_space<vmem>>, vector<8x512xf32>,
    %c495_i32_75 = arith.constant 495 : i32
    %107 = tpu.dynamic_rotate %68 by %c495_i32_75 dim 1 : vector<8x512xf32>, i32 -> vector<8x512xf32>
    %c7_76 = arith.constant 7 : index
    %c0_77 = arith.constant 0 : index
    %108 = vector.load %arg3[%c7_76, %c0_77] : memref<8x512xf32, #tpu.memory_space<vmem>>, vector<1x512xf32>
    %109 = vector.broadcast %108 : vector<1x512xf32> to vector<8x512xf32>
    %110 = arith.mulf %107, %109 : vector<8x512xf32>
    %c64_78 = arith.constant 64 : index
    %c0_79 = arith.constant 0 : index
    %111 = vector.load %arg5[%c64_78, %c0_79] : memref<72x512xf32, #tpu.memory_space<vmem>>, vector<8x512xf32>
    tpu.vector_store %arg5[%c64_78, %c0_79], %110 {strides = array<i32>} : memref<72x512xf32, #tpu.memory_space<vmem>>, vector<8x512xf32>,
    %c0_80 = arith.constant 0 : index
    %c0_81 = arith.constant 0 : index
    %112 = vector.load %arg5[%c0_80, %c0_81] : memref<72x512xf32, #tpu.memory_space<vmem>>, vector<72x512xf32>
    %cst_82 = arith.constant dense<0.000000e+00> : vector<8x512xf32>
    %113 = tpu.matmul %70, %112, %cst_82 {dimension_numbers = #tpu.dot_dimension_numbers<[1], [0], [0], [1], [0, 0, 1, 1], [], []>} : vector<8x72xf32>, vector<72x512xf32>, vector<8x512xf32> -> vector<8x512xf32>
    %c0_83 = arith.constant 0 : index
    %c2_84 = arith.constant 2 : index
    %114 = vector.load %arg2[%c0_83, %c2_84] : memref<8x4xf32, #tpu.memory_space<vmem>>, vector<8x1xf32>
    %c0_85 = arith.constant 0 : index
    %c3_86 = arith.constant 3 : index
    %115 = vector.load %arg2[%c0_85, %c3_86] : memref<8x4xf32, #tpu.memory_space<vmem>>, vector<8x1xf32>
    %cst_87 = arith.constant dense<0.000000e+00> : vector<8xf32>
    %116 = vector.multi_reduction <add>, %113, %cst_87 [1] : vector<8x512xf32> to vector<8xf32>
    %117 = vector.shape_cast %116 : vector<8xf32> to vector<8x1xf32>
    %cst_88 = arith.constant 0.001953125 : f32
    %118 = vector.broadcast %cst_88 : f32 to vector<8x1xf32>
    %119 = arith.mulf %117, %118 : vector<8x1xf32>
    %120 = vector.broadcast %119 : vector<8x1xf32> to vector<8x512xf32>
    %121 = arith.subf %113, %120 : vector<8x512xf32>
    %122 = arith.mulf %121, %121 : vector<8x512xf32>
    %cst_89 = arith.constant dense<0.000000e+00> : vector<8xf32>
    %123 = vector.multi_reduction <add>, %122, %cst_89 [1] : vector<8x512xf32> to vector<8xf32>
    %124 = vector.shape_cast %123 : vector<8xf32> to vector<8x1xf32>
    %cst_90 = arith.constant 0.001953125 : f32
    %125 = vector.broadcast %cst_90 : f32 to vector<8x1xf32>
    %126 = arith.mulf %124, %125 : vector<8x1xf32>
    %cst_91 = arith.constant 9.99999974E-6 : f32
    %127 = vector.broadcast %cst_91 : f32 to vector<8x1xf32>
    %128 = arith.addf %126, %127 : vector<8x1xf32>
    %129 = math.rsqrt %128 : vector<8x1xf32>
    %130 = arith.mulf %114, %129 : vector<8x1xf32>
    %131 = vector.broadcast %130 : vector<8x1xf32> to vector<8x512xf32>
    %132 = arith.mulf %121, %131 : vector<8x512xf32>
    %133 = vector.broadcast %115 : vector<8x1xf32> to vector<8x512xf32>
    %134 = arith.addf %132, %133 : vector<8x512xf32>
    %c0_92 = arith.constant 0 : index
    %c0_93 = arith.constant 0 : index
    %135 = vector.load %arg0[%c0_92, %c0_93] : memref<8x512xf32, #tpu.memory_space<vmem>>, vector<8x512xf32>
    %136 = arith.addf %134, %135 : vector<8x512xf32>
    %c0_94 = arith.constant 0 : index
    %c0_95 = arith.constant 0 : index
    %137 = vector.load %arg4[%c0_94, %c0_95] : memref<8x512xf32, #tpu.memory_space<vmem>>, vector<8x512xf32>
    tpu.vector_store %arg4[%c0_94, %c0_95], %136 {strides = array<i32>} : memref<8x512xf32, #tpu.memory_space<vmem>>, vector<8x512xf32>,
    return
  }
}

</mosaic_0001>

<llo_original>
// kernel: tpu_custom_call.1
$region0: #{tpu_custom_call.1}
  #allocation0 [shape = 'u32[]', space=smem, size = 0x4, offset = 0x4, fixed_abs, tag = 'smem constant byte address 0x4 - core index']
  #allocation1 [shape = 'u32[144,128]{1,0:T(1,128)}', space=vmem, size = 0x12000, scoped, tag = 'internal scratch']
  #allocation2 [shape = 'f32[72,512]{1,0:T(8,128)}', space=vmem, size = 0x24000, scoped, tag = 'scratch operand']
  %s0 = inlined_call_operand.hbm [shape: f32[8,512], index: 0, kind: input, shape index: {}]
  %s1 = inlined_call_operand.hbm [shape: f32[2,8,72], index: 1, kind: input, shape index: {}]
  %s2 = inlined_call_operand.vmem [shape: f32[8,4], index: 2, kind: input, shape index: {}]
  %s3 = inlined_call_operand.hbm [shape: f32[8,512], index: 3, kind: input, shape index: {}]
  %s4 = inlined_call_operand.hbm [shape: f32[8,512], index: 4, kind: output, shape index: {}]
  %s5 = sld [smem:[#allocation0]]
  $region38: #{tpu_custom_call.1} parent=0
    _
  %s7 = ssub.s32 1, %s5
  %s8 = scalar_select 0, %s7, %s5
  $region1: #{tpu_custom_call.1} parent=0
    #allocation3 [shape = 'u8[16384]{0}', space=vmem, size = 0x4000, scoped, tag = 'input window, operand 0, single buffered']
    #allocation4 [shape = 's32[1]{0}', space=sflag, size = 0x4, scoped, tag = 'scoped memory for tpu_custom_call.1']
    #allocation5 [shape = 's32[1]{0}', space=sflag, size = 0x4, scoped, tag = 'scoped memory for tpu_custom_call.1']
    #allocation6 [shape = 'u8[8192]{0}', space=vmem, size = 0x2000, scoped, tag = 'input window, operand 1, single buffered']
    #allocation7 [shape = 's32[1]{0}', space=sflag, size = 0x4, scoped, tag = 'scoped memory for tpu_custom_call.1']
    #allocation8 [shape = 'u8[16384]{0}', space=vmem, size = 0x4000, scoped, tag = 'input window, operand 3, single buffered']
    #allocation9 [shape = 'u8[16384]{0}', space=vmem, size = 0x4000, scoped, tag = 'output window, operand 0, single buffered']
    %9 = vsyncpa [#allocation4], 0
    %10 = vsyncpa [#allocation7], 0
    %11 = vsyncpa [#allocation5], 0
    // Predicated region
    $region2: #{tpu_custom_call.1} parent=1 // pred_check
      _
    $region3: #{tpu_custom_call.1} parent=1 // pred_check_branch
      %13 = sbr.rel (0) target = $region5
    $region4: #{tpu_custom_call.1} parent=1 // pred_region
      %s15 = ssub.s32 512, 512
      %16 = vsyncadd [#allocation4], %s15
      %s18 = sshll.u32 [#allocation3], 4
      %s19 = int_to_ptr.vmem [resolvable:$true] %s18
      %21 = dma.hbm_to_vmem [thread:$0]  %s0, 512, %s19, [#allocation4]
    $region5: #{tpu_custom_call.1} parent=1 // pred_fallthru
      _
    // Predicated region
    $region6: #{tpu_custom_call.1} parent=1 // pred_check
      _
    $region7: #{tpu_custom_call.1} parent=1 // pred_check_branch
      %23 = sbr.rel (0) target = $region9
    $region8: #{tpu_custom_call.1} parent=1 // pred_region
      %s25 = ssub.s32 256, 256
      %26 = vsyncadd [#allocation7], %s25
      %s27 = sshll.u32 [#allocation6], 4
      %s28 = int_to_ptr.vmem [resolvable:$true] %s27
      %33 = dma.hbm_to_vmem [thread:$0]  %s1, 256, %s28, [#allocation7], 128, 128, 8
    $region9: #{tpu_custom_call.1} parent=1 // pred_fallthru
      _
    // Predicated region
    $region10: #{tpu_custom_call.1} parent=1 // pred_check
      _
    $region11: #{tpu_custom_call.1} parent=1 // pred_check_branch
      %35 = sbr.rel (0) target = $region13
    $region12: #{tpu_custom_call.1} parent=1 // pred_region
      _
    $region13: #{tpu_custom_call.1} parent=1 // pred_fallthru
      _
    // Predicated region
    $region14: #{tpu_custom_call.1} parent=1 // pred_check
      _
    $region15: #{tpu_custom_call.1} parent=1 // pred_check_branch
      %37 = sbr.rel (0) target = $region17
    $region16: #{tpu_custom_call.1} parent=1 // pred_region
      %s39 = ssub.s32 512, 512
      %40 = vsyncadd [#allocation7], %s39
      %s42 = sshll.u32 [#allocation8], 4
      %s43 = int_to_ptr.vmem [resolvable:$true] %s42
      %45 = dma.hbm_to_vmem [thread:$0]  %s3, 512, %s43, [#allocation7]
    $region17: #{tpu_custom_call.1} parent=1 // pred_fallthru
      _
    // Predicated region
    $region18: #{tpu_custom_call.1} parent=1 // pred_check
      _
    $region19: #{tpu_custom_call.1} parent=1 // pred_check_branch
      %47 = sbr.rel (0) target = $region21
    $region20: #{tpu_custom_call.1} parent=1 // pred_region
      %48 = dma.done [#allocation4], 512
    $region21: #{tpu_custom_call.1} parent=1 // pred_fallthru
      _
    // Predicated region
    $region22: #{tpu_custom_call.1} parent=1 // pred_check
      _
    $region23: #{tpu_custom_call.1} parent=1 // pred_check_branch
      %50 = sbr.rel (0) target = $region25
    $region24: #{tpu_custom_call.1} parent=1 // pred_region
      %51 = dma.done [#allocation7], 256
    $region25: #{tpu_custom_call.1} parent=1 // pred_fallthru
      _
    // Predicated region
    $region26: #{tpu_custom_call.1} parent=1 // pred_check
      _
    $region27: #{tpu_custom_call.1} parent=1 // pred_check_branch
      %53 = sbr.rel (0) target = $region29
    $region28: #{tpu_custom_call.1} parent=1 // pred_region
      %54 = dma.done [#allocation7], 512
    $region29: #{tpu_custom_call.1} parent=1 // pred_fallthru
      _
    %v55 = vld [vmem:[#allocation3] sm:$0xff]
    %v56 = vld [vmem:[#allocation3 + $0x8] sm:$0xff]
    %v57 = vld [vmem:[#allocation3 + $0x10] sm:$0xff]
    %v58 = vld [vmem:[#allocation3 + $0x18] sm:$0xff]
    %v59 = vld [vmem:[#allocation6] sm:$0xff]
    %60 = vrot.lane.b32.xlu0 %v55, 17
    %v61 = vpop.permute.xlu0 %60
    %62 = vrot.lane.b32.xlu0 %v56, 17
    %v63 = vpop.permute.xlu0 %62
    %64 = vrot.lane.b32.xlu0 %v57, 17
    %v65 = vpop.permute.xlu0 %64
    %66 = vrot.lane.b32.xlu0 %v58, 17
    %v67 = vpop.permute.xlu0 %66
    %v68 = vlaneseq
    %v69 = vand.u32 %v68, 127
    %vm70 = vcmp.lt.s32.totalorder %v69, 17
    %v71 = vsel %vm70, %v65, %v67
    %v72 = vsel %vm70, %v63, %v65
    %v73 = vsel %vm70, %v61, %v63
    %v74 = vsel %vm70, %v67, %v61
    %v75 = vld [vmem:[#allocation8] ss:$8 sm:$0xf]
    %v77 = vlaneseq
    %v78 = vshrl.u32 %v77, 7
    %v79 = vsub.s32 0, %v78
    %v80 = vrot.slane %v75, %v79
    %v81 = vlaneseq
    %v82 = vshrl.u32 %v81, 7
    %v83 = vsub.s32 1, %v82
    %v84 = vrot.slane %v75, %v83
    %v85 = vlaneseq
    %v86 = vshrl.u32 %v85, 7
    %v87 = vsub.s32 2, %v86
    %v88 = vrot.slane %v75, %v87
    %v89 = vlaneseq
    %v90 = vshrl.u32 %v89, 7
    %v91 = vsub.s32 3, %v90
    %v92 = vrot.slane %v75, %v91
    %v97 = vmul.f32 %v74, %v80
    %v98 = vmul.f32 %v73, %v84
    %v99 = vmul.f32 %v72, %v88
    %v100 = vmul.f32 %v71, %v92
    %101 = vst [vmem:[#allocation2] sm:$0xff] %v97
    %102 = vst [vmem:[#allocation2 + $0x8] sm:$0xff] %v98
    %103 = vst [vmem:[#allocation2 + $0x10] sm:$0xff] %v99
    %104 = vst [vmem:[#allocation2 + $0x18] sm:$0xff] %v100
    %105 = vrot.lane.b32.xlu0 %v55, 16
    %v106 = vpop.permute.xlu0 %105
    %107 = vrot.lane.b32.xlu0 %v56, 16
    %v108 = vpop.permute.xlu0 %107
    %109 = vrot.lane.b32.xlu0 %v57, 16
    %v110 = vpop.permute.xlu0 %109
    %111 = vrot.lane.b32.xlu0 %v58, 16
    %v112 = vpop.permute.xlu0 %111
    %vm113 = vcmp.lt.s32.totalorder %v69, 16
    %v114 = vsel %vm113, %v110, %v112
    %v115 = vsel %vm113, %v108, %v110
    %v116 = vsel %vm113, %v106, %v108
    %v117 = vsel %vm113, %v112, %v106
    %s118 = scalar_lea.vmem [#allocation8], 1
    %v119 = vld [vmem:[%s118] ss:$8 sm:$0xf]
    %v121 = vlaneseq
    %v122 = vshrl.u32 %v121, 7
    %v123 = vsub.s32 0, %v122
    %v124 = vrot.slane %v119, %v123
    %v125 = vlaneseq
    %v126 = vshrl.u32 %v125, 7
    %v127 = vsub.s32 1, %v126
    %v128 = vrot.slane %v119, %v127
    %v129 = vlaneseq
    %v130 = vshrl.u32 %v129, 7
    %v131 = vsub.s32 2, %v130
    %v132 = vrot.slane %v119, %v131
    %v133 = vlaneseq
    %v134 = vshrl.u32 %v133, 7
    %v135 = vsub.s32 3, %v134
    %v136 = vrot.slane %v119, %v135
    %v141 = vmul.f32 %v117, %v124
    %v142 = vmul.f32 %v116, %v128
    %v143 = vmul.f32 %v115, %v132
    %v144 = vmul.f32 %v114, %v136
    %145 = vst [vmem:[#allocation2 + $0x20] sm:$0xff] %v141
    %146 = vst [vmem:[#allocation2 + $0x28] sm:$0xff] %v142
    %147 = vst [vmem:[#allocation2 + $0x30] sm:$0xff] %v143
    %148 = vst [vmem:[#allocation2 + $0x38] sm:$0xff] %v144
    %149 = vrot.lane.b32.xlu0 %v55, 15
    %v150 = vpop.permute.xlu0 %149
    %151 = vrot.lane.b32.xlu0 %v56, 15
    %v152 = vpop.permute.xlu0 %151
    %153 = vrot.lane.b32.xlu0 %v57, 15
    %v154 = vpop.permute.xlu0 %153
    %155 = vrot.lane.b32.xlu0 %v58, 15
    %v156 = vpop.permute.xlu0 %155
    %vm157 = vcmp.lt.s32.totalorder %v69, 15
    %v158 = vsel %vm157, %v154, %v156
    %v159 = vsel %vm157, %v152, %v154
    %v160 = vsel %vm157, %v150, %v152
    %v161 = vsel %vm157, %v156, %v150
    %s162 = scalar_lea.vmem [#allocation8], 2
    %v163 = vld [vmem:[%s162] ss:$8 sm:$0xf]
    %v165 = vlaneseq
    %v166 = vshrl.u32 %v165, 7
    %v167 = vsub.s32 0, %v166
    %v168 = vrot.slane %v163, %v167
    %v169 = vlaneseq
    %v170 = vshrl.u32 %v169, 7
    %v171 = vsub.s32 1, %v170
    %v172 = vrot.slane %v163, %v171
    %v173 = vlaneseq
    %v174 = vshrl.u32 %v173, 7
    %v175 = vsub.s32 2, %v174
    %v176 = vrot.slane %v163, %v175
    %v177 = vlaneseq
    %v178 = vshrl.u32 %v177, 7
    %v179 = vsub.s32 3, %v178
    %v180 = vrot.slane %v163, %v179
    %v185 = vmul.f32 %v161, %v168
    %v186 = vmul.f32 %v160, %v172
    %v187 = vmul.f32 %v159, %v176
    %v188 = vmul.f32 %v158, %v180
    %189 = vst [vmem:[#allocation2 + $0x40] sm:$0xff] %v185
    %190 = vst [vmem:[#allocation2 + $0x48] sm:$0xff] %v186
    %191 = vst [vmem:[#allocation2 + $0x50] sm:$0xff] %v187
    %192 = vst [vmem:[#allocation2 + $0x58] sm:$0xff] %v188
    %193 = vrot.lane.b32.xlu0 %v55, 1
    %v194 = vpop.permute.xlu0 %193
    %195 = vrot.lane.b32.xlu0 %v56, 1
    %v196 = vpop.permute.xlu0 %195
    %197 = vrot.lane.b32.xlu0 %v57, 1
    %v198 = vpop.permute.xlu0 %197
    %199 = vrot.lane.b32.xlu0 %v58, 1
    %v200 = vpop.permute.xlu0 %199
    %vm201 = vcmp.lt.s32.totalorder %v69, 1
    %v202 = vsel %vm201, %v198, %v200
    %v203 = vsel %vm201, %v196, %v198
    %v204 = vsel %vm201, %v194, %v196
    %v205 = vsel %vm201, %v200, %v194
    %s206 = scalar_lea.vmem [#allocation8], 3
    %v207 = vld [vmem:[%s206] ss:$8 sm:$0xf]
    %v209 = vlaneseq
    %v210 = vshrl.u32 %v209, 7
    %v211 = vsub.s32 0, %v210
    %v212 = vrot.slane %v207, %v211
    %v213 = vlaneseq
    %v214 = vshrl.u32 %v213, 7
    %v215 = vsub.s32 1, %v214
    %v216 = vrot.slane %v207, %v215
    %v217 = vlaneseq
    %v218 = vshrl.u32 %v217, 7
    %v219 = vsub.s32 2, %v218
    %v220 = vrot.slane %v207, %v219
    %v221 = vlaneseq
    %v222 = vshrl.u32 %v221, 7
    %v223 = vsub.s32 3, %v222
    %v224 = vrot.slane %v207, %v223
    %v229 = vmul.f32 %v205, %v212
    %v230 = vmul.f32 %v204, %v216
    %v231 = vmul.f32 %v203, %v220
    %v232 = vmul.f32 %v202, %v224
    %233 = vst [vmem:[#allocation2 + $0x60] sm:$0xff] %v229
    %234 = vst [vmem:[#allocation2 + $0x68] sm:$0xff] %v230
    %235 = vst [vmem:[#allocation2 + $0x70] sm:$0xff] %v231
    %236 = vst [vmem:[#allocation2 + $0x78] sm:$0xff] %v232
    %237 = vst [vmem:[#allocation2 + $0x80] sm:$0xff] %v55
    %238 = vst [vmem:[#allocation2 + $0x88] sm:$0xff] %v56
    %239 = vst [vmem:[#allocation2 + $0x90] sm:$0xff] %v57
    %240 = vst [vmem:[#allocation2 + $0x98] sm:$0xff] %v58
    %241 = vrot.lane.b32.xlu0 %v55, 127
    %v242 = vpop.permute.xlu0 %241
    %243 = vrot.lane.b32.xlu0 %v56, 127
    %v244 = vpop.permute.xlu0 %243
    %245 = vrot.lane.b32.xlu0 %v57, 127
    %v246 = vpop.permute.xlu0 %245
    %247 = vrot.lane.b32.xlu0 %v58, 127
    %v248 = vpop.permute.xlu0 %247
    %vm249 = vcmp.lt.s32.totalorder %v69, 127
    %v250 = vsel %vm249, %v246, %v248
    %v251 = vsel %vm249, %v244, %v246
    %v252 = vsel %vm249, %v242, %v244
    %v253 = vsel %vm249, %v248, %v242
    %s254 = scalar_lea.vmem [#allocation8], 4
    %v255 = vld [vmem:[%s254] ss:$8 sm:$0xf]
    %v257 = vlaneseq
    %v258 = vshrl.u32 %v257, 7
    %v259 = vsub.s32 0, %v258
    %v260 = vrot.slane %v255, %v259
    %v261 = vlaneseq
    %v262 = vshrl.u32 %v261, 7
    %v263 = vsub.s32 1, %v262
    %v264 = vrot.slane %v255, %v263
    %v265 = vlaneseq
    %v266 = vshrl.u32 %v265, 7
    %v267 = vsub.s32 2, %v266
    %v268 = vrot.slane %v255, %v267
    %v269 = vlaneseq
    %v270 = vshrl.u32 %v269, 7
    %v271 = vsub.s32 3, %v270
    %v272 = vrot.slane %v255, %v271
    %v277 = vmul.f32 %v252, %v260
    %v278 = vmul.f32 %v251, %v264
    %v279 = vmul.f32 %v250, %v268
    %v280 = vmul.f32 %v253, %v272
    %281 = vst [vmem:[#allocation2 + $0xa0] sm:$0xff] %v277
    %282 = vst [vmem:[#allocation2 + $0xa8] sm:$0xff] %v278
    %283 = vst [vmem:[#allocation2 + $0xb0] sm:$0xff] %v279
    %284 = vst [vmem:[#allocation2 + $0xb8] sm:$0xff] %v280
    %285 = vrot.lane.b32.xlu0 %v55, 113
    %v286 = vpop.permute.xlu0 %285
    %287 = vrot.lane.b32.xlu0 %v56, 113
    %v288 = vpop.permute.xlu0 %287
    %289 = vrot.lane.b32.xlu0 %v57, 113
    %v290 = vpop.permute.xlu0 %289
    %291 = vrot.lane.b32.xlu0 %v58, 113
    %v292 = vpop.permute.xlu0 %291
    %vm293 = vcmp.lt.s32.totalorder %v69, 113
    %v294 = vsel %vm293, %v290, %v292
    %v295 = vsel %vm293, %v288, %v290
    %v296 = vsel %vm293, %v286, %v288
    %v297 = vsel %vm293, %v292, %v286
    %s298 = scalar_lea.vmem [#allocation8], 5
    %v299 = vld [vmem:[%s298] ss:$8 sm:$0xf]
    %v301 = vlaneseq
    %v302 = vshrl.u32 %v301, 7
    %v303 = vsub.s32 0, %v302
    %v304 = vrot.slane %v299, %v303
    %v305 = vlaneseq
    %v306 = vshrl.u32 %v305, 7
    %v307 = vsub.s32 1, %v306
    %v308 = vrot.slane %v299, %v307
    %v309 = vlaneseq
    %v310 = vshrl.u32 %v309, 7
    %v311 = vsub.s32 2, %v310
    %v312 = vrot.slane %v299, %v311
    %v313 = vlaneseq
    %v314 = vshrl.u32 %v313, 7
    %v315 = vsub.s32 3, %v314
    %v316 = vrot.slane %v299, %v315
    %v321 = vmul.f32 %v296, %v304
    %v322 = vmul.f32 %v295, %v308
    %v323 = vmul.f32 %v294, %v312
    %v324 = vmul.f32 %v297, %v316
    %325 = vst [vmem:[#allocation2 + $0xc0] sm:$0xff] %v321
    %326 = vst [vmem:[#allocation2 + $0xc8] sm:$0xff] %v322
    %327 = vst [vmem:[#allocation2 + $0xd0] sm:$0xff] %v323
    %328 = vst [vmem:[#allocation2 + $0xd8] sm:$0xff] %v324
    %329 = vrot.lane.b32.xlu0 %v55, 112
    %v330 = vpop.permute.xlu0 %329
    %331 = vrot.lane.b32.xlu0 %v56, 112
    %v332 = vpop.permute.xlu0 %331
    %333 = vrot.lane.b32.xlu0 %v57, 112
    %v334 = vpop.permute.xlu0 %333
    %335 = vrot.lane.b32.xlu0 %v58, 112
    %v336 = vpop.permute.xlu0 %335
    %vm337 = vcmp.lt.s32.totalorder %v69, 112
    %v338 = vsel %vm337, %v334, %v336
    %v339 = vsel %vm337, %v332, %v334
    %v340 = vsel %vm337, %v330, %v332
    %v341 = vsel %vm337, %v336, %v330
    %s342 = scalar_lea.vmem [#allocation8], 6
    %v343 = vld [vmem:[%s342] ss:$8 sm:$0xf]
    %v345 = vlaneseq
    %v346 = vshrl.u32 %v345, 7
    %v347 = vsub.s32 0, %v346
    %v348 = vrot.slane %v343, %v347
    %v349 = vlaneseq
    %v350 = vshrl.u32 %v349, 7
    %v351 = vsub.s32 1, %v350
    %v352 = vrot.slane %v343, %v351
    %v353 = vlaneseq
    %v354 = vshrl.u32 %v353, 7
    %v355 = vsub.s32 2, %v354
    %v356 = vrot.slane %v343, %v355
    %v357 = vlaneseq
    %v358 = vshrl.u32 %v357, 7
    %v359 = vsub.s32 3, %v358
    %v360 = vrot.slane %v343, %v359
    %v365 = vmul.f32 %v340, %v348
    %v366 = vmul.f32 %v339, %v352
    %v367 = vmul.f32 %v338, %v356
    %v368 = vmul.f32 %v341, %v360
    %369 = vst [vmem:[#allocation2 + $0xe0] sm:$0xff] %v365
    %370 = vst [vmem:[#allocation2 + $0xe8] sm:$0xff] %v366
    %371 = vst [vmem:[#allocation2 + $0xf0] sm:$0xff] %v367
    %372 = vst [vmem:[#allocation2 + $0xf8] sm:$0xff] %v368
    %373 = vrot.lane.b32.xlu0 %v55, 111
    %v374 = vpop.permute.xlu0 %373
    %375 = vrot.lane.b32.xlu0 %v56, 111
    %v376 = vpop.permute.xlu0 %375
    %377 = vrot.lane.b32.xlu0 %v57, 111
    %v378 = vpop.permute.xlu0 %377
    %379 = vrot.lane.b32.xlu0 %v58, 111
    %v380 = vpop.permute.xlu0 %379
    %vm381 = vcmp.lt.s32.totalorder %v69, 111
    %v382 = vsel %vm381, %v378, %v380
    %v383 = vsel %vm381, %v376, %v378
    %v384 = vsel %vm381, %v374, %v376
    %v385 = vsel %vm381, %v380, %v374
    %s386 = scalar_lea.vmem [#allocation8], 7
    %v387 = vld [vmem:[%s386] ss:$8 sm:$0xf]
    %v389 = vlaneseq
    %v390 = vshrl.u32 %v389, 7
    %v391 = vsub.s32 0, %v390
    %v392 = vrot.slane %v387, %v391
    %v393 = vlaneseq
    %v394 = vshrl.u32 %v393, 7
    %v395 = vsub.s32 1, %v394
    %v396 = vrot.slane %v387, %v395
    %v397 = vlaneseq
    %v398 = vshrl.u32 %v397, 7
    %v399 = vsub.s32 2, %v398
    %v400 = vrot.slane %v387, %v399
    %v401 = vlaneseq
    %v402 = vshrl.u32 %v401, 7
    %v403 = vsub.s32 3, %v402
    %v404 = vrot.slane %v387, %v403
    %v409 = vmul.f32 %v384, %v392
    %v410 = vmul.f32 %v383, %v396
    %v411 = vmul.f32 %v382, %v400
    %v412 = vmul.f32 %v385, %v404
    %413 = vst [vmem:[#allocation2 + $0x100] sm:$0xff] %v409
    %414 = vst [vmem:[#allocation2 + $0x108] sm:$0xff] %v410
    %415 = vst [vmem:[#allocation2 + $0x110] sm:$0xff] %v411
    %416 = vst [vmem:[#allocation2 + $0x118] sm:$0xff] %v412
    %v417 = vld [vmem:[#allocation2] sm:$0xff]
    %v418 = vld [vmem:[#allocation2 + $0x8] sm:$0xff]
    %v419 = vld [vmem:[#allocation2 + $0x10] sm:$0xff]
    %v420 = vld [vmem:[#allocation2 + $0x18] sm:$0xff]
    %v421 = vld [vmem:[#allocation2 + $0x20] sm:$0xff]
    %v422 = vld [vmem:[#allocation2 + $0x28] sm:$0xff]
    %v423 = vld [vmem:[#allocation2 + $0x30] sm:$0xff]
    %v424 = vld [vmem:[#allocation2 + $0x38] sm:$0xff]
    %v425 = vld [vmem:[#allocation2 + $0x40] sm:$0xff]
    %v426 = vld [vmem:[#allocation2 + $0x48] sm:$0xff]
    %v427 = vld [vmem:[#allocation2 + $0x50] sm:$0xff]
    %v428 = vld [vmem:[#allocation2 + $0x58] sm:$0xff]
    %v429 = vld [vmem:[#allocation2 + $0x60] sm:$0xff]
    %v430 = vld [vmem:[#allocation2 + $0x68] sm:$0xff]
    %v431 = vld [vmem:[#allocation2 + $0x70] sm:$0xff]
    %v432 = vld [vmem:[#allocation2 + $0x78] sm:$0xff]
    %v433 = vld [vmem:[#allocation2 + $0x80] sm:$0xff]
    %v434 = vld [vmem:[#allocation2 + $0x88] sm:$0xff]
    %v435 = vld [vmem:[#allocation2 + $0x90] sm:$0xff]
    %v436 = vld [vmem:[#allocation2 + $0x98] sm:$0xff]
    %v437 = vld [vmem:[#allocation2 + $0xa0] sm:$0xff]
    %v438 = vld [vmem:[#allocation2 + $0xa8] sm:$0xff]
    %v439 = vld [vmem:[#allocation2 + $0xb0] sm:$0xff]
    %v440 = vld [vmem:[#allocation2 + $0xb8] sm:$0xff]
    %v441 = vld [vmem:[#allocation2 + $0xc0] sm:$0xff]
    %v442 = vld [vmem:[#allocation2 + $0xc8] sm:$0xff]
    %v443 = vld [vmem:[#allocation2 + $0xd0] sm:$0xff]
    %v444 = vld [vmem:[#allocation2 + $0xd8] sm:$0xff]
    %v445 = vld [vmem:[#allocation2 + $0xe0] sm:$0xff]
    %v446 = vld [vmem:[#allocation2 + $0xe8] sm:$0xff]
    %v447 = vld [vmem:[#allocation2 + $0xf0] sm:$0xff]
    %v448 = vld [vmem:[#allocation2 + $0xf8] sm:$0xff]
    %v449 = vld [vmem:[#allocation2 + $0x100] sm:$0xff]
    %v450 = vld [vmem:[#allocation2 + $0x108] sm:$0xff]
    %v451 = vld [vmem:[#allocation2 + $0x110] sm:$0xff]
    %v452 = vld [vmem:[#allocation2 + $0x118] sm:$0xff]
    %vm453 = vcmask 588800
    %v455 = vsel %vm453, %v59, 0
    %457 = vmatprep.subr.mxu0 %v418
    %458 = vmatpush1.msra.mxu0 %v417
    %459 = vmatprep.subr.mxu0 %v422
    %460 = vmatpush1.msra.mxu0 %v421
    %461 = vmatprep.subr.mxu0 %v426
    %462 = vmatpush1.msra.mxu0 %v425
    %463 = vmatprep.subr.mxu0 %v430
    %464 = vmatpush1.msra.mxu0 %v429
    %465 = vmatprep.subr.mxu0 %v434
    %466 = vmatpush1.msra.mxu0 %v433
    %467 = vmatprep.subr.mxu0 %v438
    %468 = vmatpush1.msra.mxu0 %v437
    %469 = vmatprep.subr.mxu0 %v442
    %470 = vmatpush1.msra.mxu0 %v441
    %471 = vmatprep.subr.mxu0 %v446
    %472 = vmatpush1.msra.mxu0 %v445
    %473 = vmatprep.subr.mxu0 %v450
    %474 = vmatpush1.msra.mxu0 %v449
    %475 = vmatprep.subr.mxu0 0.0
    %476 = vmatpush1.msra.mxu0 0.0
    %477 = vmatprep.subr.mxu0 0.0
    %478 = vmatpush1.msra.mxu0 0.0
    %479 = vmatprep.subr.mxu0 0.0
    %480 = vmatpush1.msra.mxu0 0.0
    %481 = vmatprep.subr.mxu0 0.0
    %482 = vmatpush1.msra.mxu0 0.0
    %483 = vmatprep.subr.mxu0 0.0
    %484 = vmatpush1.msra.mxu0 0.0
    %485 = vmatprep.subr.mxu0 0.0
    %486 = vmatpush1.msra.mxu0 0.0
    %487 = vmatprep.subr.mxu0 0.0
    %488 = vmatpush1.msra.mxu0 0.0
    %489 = vmatprep.subr.mxu0 0.0
    %490 = vmatpush1.msra.mxu0 0.0
    %491 = vmatprep.subr.mxu0 0.0
    %492 = vmatpush1.msra.mxu0 0.0
    %493 = vmatprep.subr.mxu0 0.0
    %494 = vmatpush1.msra.mxu0 0.0
    %495 = vmatprep.subr.mxu0 0.0
    %496 = vmatpush1.msra.mxu0 0.0
    %497 = vmatprep.subr.mxu0 0.0
    %498 = vmatpush1.msra.mxu0 0.0
    %499 = vmatprep.subr.mxu0 0.0
    %500 = vmatpush1.msra.mxu0 0.0
    %501 = vmatprep.subr.mxu0 0.0
    %502 = vmatpush1.msra.mxu0 0.0
    %503 = vmatprep.subr.mxu0 0.0
    %504 = vmatpush1.msra.mxu0 0.0
    %505 = vmatprep.subr.mxu0 0.0
    %506 = vmatpush1.msra.mxu0 0.0
    %507 = vmatprep.subr.mxu0 0.0
    %508 = vmatpush1.msra.mxu0 0.0
    %509 = vmatprep.subr.mxu0 0.0
    %510 = vmatpush1.msra.mxu0 0.0
    %511 = vmatprep.subr.mxu0 0.0
    %512 = vmatpush1.msra.mxu0 0.0
    %513 = vmatprep.subr.mxu0 0.0
    %514 = vmatpush1.msra.mxu0 0.0
    %515 = vmatprep.subr.mxu0 0.0
    %516 = vmatpush1.msra.mxu0 0.0
    %517 = vmatprep.subr.mxu0 0.0
    %518 = vmatpush1.msra.mxu0 0.0
    %519 = vmatprep.subr.mxu0 0.0
    %520 = vmatpush1.msra.mxu0 0.0
    %521 = vmatprep.mubr.f32.mxu0 0.0
    %522 = vmatmul.mubr.f32.gmra.mrb[0].mxu0 %v455
    %v523 = vpop.f32.mrb[0].mxu0
    %v524 = vadd.f32 0.0, %v523
    %v525 = vpop.f32.mrb[0].mxu0
    %v526 = vadd.f32 0.0, %v525
    %527 = vdwg.mxu0
    %528 = vmatprep.subr.mxu0 %v420
    %529 = vmatpush1.msra.mxu0 %v419
    %530 = vmatprep.subr.mxu0 %v424
    %531 = vmatpush1.msra.mxu0 %v423
    %532 = vmatprep.subr.mxu0 %v428
    %533 = vmatpush1.msra.mxu0 %v427
    %534 = vmatprep.subr.mxu0 %v432
    %535 = vmatpush1.msra.mxu0 %v431
    %536 = vmatprep.subr.mxu0 %v436
    %537 = vmatpush1.msra.mxu0 %v435
    %538 = vmatprep.subr.mxu0 %v440
    %539 = vmatpush1.msra.mxu0 %v439
    %540 = vmatprep.subr.mxu0 %v444
    %541 = vmatpush1.msra.mxu0 %v443
    %542 = vmatprep.subr.mxu0 %v448
    %543 = vmatpush1.msra.mxu0 %v447
    %544 = vmatprep.subr.mxu0 %v452
    %545 = vmatpush1.msra.mxu0 %v451
    %546 = vmatprep.subr.mxu0 0.0
    %547 = vmatpush1.msra.mxu0 0.0
    %548 = vmatprep.subr.mxu0 0.0
    %549 = vmatpush1.msra.mxu0 0.0
    %550 = vmatprep.subr.mxu0 0.0
    %551 = vmatpush1.msra.mxu0 0.0
    %552 = vmatprep.subr.mxu0 0.0
    %553 = vmatpush1.msra.mxu0 0.0
    %554 = vmatprep.subr.mxu0 0.0
    %555 = vmatpush1.msra.mxu0 0.0
    %556 = vmatprep.subr.mxu0 0.0
    %557 = vmatpush1.msra.mxu0 0.0
    %558 = vmatprep.subr.mxu0 0.0
    %559 = vmatpush1.msra.mxu0 0.0
    %560 = vmatprep.subr.mxu0 0.0
    %561 = vmatpush1.msra.mxu0 0.0
    %562 = vmatprep.subr.mxu0 0.0
    %563 = vmatpush1.msra.mxu0 0.0
    %564 = vmatprep.subr.mxu0 0.0
    %565 = vmatpush1.msra.mxu0 0.0
    %566 = vmatprep.subr.mxu0 0.0
    %567 = vmatpush1.msra.mxu0 0.0
    %568 = vmatprep.subr.mxu0 0.0
    %569 = vmatpush1.msra.mxu0 0.0
    %570 = vmatprep.subr.mxu0 0.0
    %571 = vmatpush1.msra.mxu0 0.0
    %572 = vmatprep.subr.mxu0 0.0
    %573 = vmatpush1.msra.mxu0 0.0
    %574 = vmatprep.subr.mxu0 0.0
    %575 = vmatpush1.msra.mxu0 0.0
    %576 = vmatprep.subr.mxu0 0.0
    %577 = vmatpush1.msra.mxu0 0.0
    %578 = vmatprep.subr.mxu0 0.0
    %579 = vmatpush1.msra.mxu0 0.0
    %580 = vmatprep.subr.mxu0 0.0
    %581 = vmatpush1.msra.mxu0 0.0
    %582 = vmatprep.subr.mxu0 0.0
    %583 = vmatpush1.msra.mxu0 0.0
    %584 = vmatprep.subr.mxu0 0.0
    %585 = vmatpush1.msra.mxu0 0.0
    %586 = vmatprep.subr.mxu0 0.0
    %587 = vmatpush1.msra.mxu0 0.0
    %588 = vmatprep.subr.mxu0 0.0
    %589 = vmatpush1.msra.mxu0 0.0
    %590 = vmatprep.subr.mxu0 0.0
    %591 = vmatpush1.msra.mxu0 0.0
    %592 = vmatprep.mubr.f32.mxu0 0.0
    %593 = vmatmul.mubr.f32.gmra.mrb[0].mxu0 %v455
    %v594 = vpop.f32.mrb[0].mxu0
    %v595 = vadd.f32 0.0, %v594
    %v596 = vpop.f32.mrb[0].mxu0
    %v597 = vadd.f32 0.0, %v596
    %598 = vdwg.mxu0
    %v599 = vld [vmem:[%s2] sm:$0xff]
    %v600 = vadd.f32 %v524, %v526
    %v601 = vadd.f32 %v600, %v595
    %v602 = vadd.f32 %v601, %v597
    %603 = vadd.xlane.f32.xlu0 %v602
    %v604 = vpop.xlane.xlu0 %603
    %v605 = vmul.f32 %v604, 0.001953125
    %v606 = vsub.f32 %v524, %v605
    %v607 = vsub.f32 %v526, %v605
    %v608 = vsub.f32 %v595, %v605
    %v609 = vsub.f32 %v597, %v605
    %v610 = vmul.f32 %v606, %v606
    %v611 = vmul.f32 %v607, %v607
    %v612 = vmul.f32 %v608, %v608
    %v613 = vmul.f32 %v609, %v609
    %v614 = vadd.f32 %v610, %v611
    %v615 = vadd.f32 %v614, %v612
    %v616 = vadd.f32 %v615, %v613
    %617 = vadd.xlane.f32.xlu0 %v616
    %v618 = vpop.xlane.xlu0 %617
    %v619 = vmul.f32 %v618, 0.001953125
    %v620 = vadd.f32 %v619, 1e-05
    %v621 = vrsqrt.pop %v620
    %v622 = vmul.f32 %v599, %v621
    %624 = vset.pattern.permute.xlu0 0
    %625 = vperm.xlu0 %624, %v622
    %v626 = vpop.permute.xlu0 %625
    %v628 = vmul.f32 %v606, %v626
    %v629 = vmul.f32 %v607, %v626
    %v630 = vmul.f32 %v608, %v626
    %v631 = vmul.f32 %v609, %v626
    %633 = vset.pattern.permute.xlu0 1
    %634 = vperm.xlu0 %633, %v599
    %v635 = vpop.permute.xlu0 %634
    %v637 = vadd.f32 %v628, %v635
    %v638 = vadd.f32 %v629, %v635
    %v639 = vadd.f32 %v630, %v635
    %v640 = vadd.f32 %v631, %v635
    %v641 = vmax.f32 %v637, 0.0
    %v642 = vmax.f32 %v638, 0.0
    %v643 = vmax.f32 %v639, 0.0
    %v644 = vmax.f32 %v640, 0.0
    %s645 = scalar_lea.vmem [#allocation6], 8
    %v646 = vld [vmem:[%s645] sm:$0xff]
    %647 = vrot.lane.b32.xlu0 %v641, 17
    %v648 = vpop.permute.xlu0 %647
    %649 = vrot.lane.b32.xlu0 %v642, 17
    %v650 = vpop.permute.xlu0 %649
    %651 = vrot.lane.b32.xlu0 %v643, 17
    %v652 = vpop.permute.xlu0 %651
    %653 = vrot.lane.b32.xlu0 %v644, 17
    %v654 = vpop.permute.xlu0 %653
    %v655 = vsel %vm70, %v652, %v654
    %v656 = vsel %vm70, %v650, %v652
    %v657 = vsel %vm70, %v648, %v650
    %v658 = vsel %vm70, %v654, %v648
    %v659 = vld [vmem:[#allocation8] ss:$8 sm:$0xf]
    %v661 = vlaneseq
    %v662 = vshrl.u32 %v661, 7
    %v663 = vsub.s32 0, %v662
    %v664 = vrot.slane %v659, %v663
    %v665 = vlaneseq
    %v666 = vshrl.u32 %v665, 7
    %v667 = vsub.s32 1, %v666
    %v668 = vrot.slane %v659, %v667
    %v669 = vlaneseq
    %v670 = vshrl.u32 %v669, 7
    %v671 = vsub.s32 2, %v670
    %v672 = vrot.slane %v659, %v671
    %v673 = vlaneseq
    %v674 = vshrl.u32 %v673, 7
    %v675 = vsub.s32 3, %v674
    %v676 = vrot.slane %v659, %v675
    %v681 = vmul.f32 %v658, %v664
    %v682 = vmul.f32 %v657, %v668
    %v683 = vmul.f32 %v656, %v672
    %v684 = vmul.f32 %v655, %v676
    %685 = vst [vmem:[#allocation2] sm:$0xff] %v681
    %686 = vst [vmem:[#allocation2 + $0x8] sm:$0xff] %v682
    %687 = vst [vmem:[#allocation2 + $0x10] sm:$0xff] %v683
    %688 = vst [vmem:[#allocation2 + $0x18] sm:$0xff] %v684
    %689 = vrot.lane.b32.xlu0 %v641, 16
    %v690 = vpop.permute.xlu0 %689
    %691 = vrot.lane.b32.xlu0 %v642, 16
    %v692 = vpop.permute.xlu0 %691
    %693 = vrot.lane.b32.xlu0 %v643, 16
    %v694 = vpop.permute.xlu0 %693
    %695 = vrot.lane.b32.xlu0 %v644, 16
    %v696 = vpop.permute.xlu0 %695
    %v697 = vsel %vm113, %v694, %v696
    %v698 = vsel %vm113, %v692, %v694
    %v699 = vsel %vm113, %v690, %v692
    %v700 = vsel %vm113, %v696, %v690
    %v701 = vld [vmem:[%s118] ss:$8 sm:$0xf]
    %v703 = vlaneseq
    %v704 = vshrl.u32 %v703, 7
    %v705 = vsub.s32 0, %v704
    %v706 = vrot.slane %v701, %v705
    %v707 = vlaneseq
    %v708 = vshrl.u32 %v707, 7
    %v709 = vsub.s32 1, %v708
    %v710 = vrot.slane %v701, %v709
    %v711 = vlaneseq
    %v712 = vshrl.u32 %v711, 7
    %v713 = vsub.s32 2, %v712
    %v714 = vrot.slane %v701, %v713
    %v715 = vlaneseq
    %v716 = vshrl.u32 %v715, 7
    %v717 = vsub.s32 3, %v716
    %v718 = vrot.slane %v701, %v717
    %v723 = vmul.f32 %v700, %v706
    %v724 = vmul.f32 %v699, %v710
    %v725 = vmul.f32 %v698, %v714
    %v726 = vmul.f32 %v697, %v718
    %727 = vst [vmem:[#allocation2 + $0x20] sm:$0xff] %v723
    %728 = vst [vmem:[#allocation2 + $0x28] sm:$0xff] %v724
    %729 = vst [vmem:[#allocation2 + $0x30] sm:$0xff] %v725
    %730 = vst [vmem:[#allocation2 + $0x38] sm:$0xff] %v726
    %731 = vrot.lane.b32.xlu0 %v641, 15
    %v732 = vpop.permute.xlu0 %731
    %733 = vrot.lane.b32.xlu0 %v642, 15
    %v734 = vpop.permute.xlu0 %733
    %735 = vrot.lane.b32.xlu0 %v643, 15
    %v736 = vpop.permute.xlu0 %735
    %737 = vrot.lane.b32.xlu0 %v644, 15
    %v738 = vpop.permute.xlu0 %737
    %v739 = vsel %vm157, %v736, %v738
    %v740 = vsel %vm157, %v734, %v736
    %v741 = vsel %vm157, %v732, %v734
    %v742 = vsel %vm157, %v738, %v732
    %v743 = vld [vmem:[%s162] ss:$8 sm:$0xf]
    %v745 = vlaneseq
    %v746 = vshrl.u32 %v745, 7
    %v747 = vsub.s32 0, %v746
    %v748 = vrot.slane %v743, %v747
    %v749 = vlaneseq
    %v750 = vshrl.u32 %v749, 7
    %v751 = vsub.s32 1, %v750
    %v752 = vrot.slane %v743, %v751
    %v753 = vlaneseq
    %v754 = vshrl.u32 %v753, 7
    %v755 = vsub.s32 2, %v754
    %v756 = vrot.slane %v743, %v755
    %v757 = vlaneseq
    %v758 = vshrl.u32 %v757, 7
    %v759 = vsub.s32 3, %v758
    %v760 = vrot.slane %v743, %v759
    %v765 = vmul.f32 %v742, %v748
    %v766 = vmul.f32 %v741, %v752
    %v767 = vmul.f32 %v740, %v756
    %v768 = vmul.f32 %v739, %v760
    %769 = vst [vmem:[#allocation2 + $0x40] sm:$0xff] %v765
    %770 = vst [vmem:[#allocation2 + $0x48] sm:$0xff] %v766
    %771 = vst [vmem:[#allocation2 + $0x50] sm:$0xff] %v767
    %772 = vst [vmem:[#allocation2 + $0x58] sm:$0xff] %v768
    %773 = vrot.lane.b32.xlu0 %v641, 1
    %v774 = vpop.permute.xlu0 %773
    %775 = vrot.lane.b32.xlu0 %v642, 1
    %v776 = vpop.permute.xlu0 %775
    %777 = vrot.lane.b32.xlu0 %v643, 1
    %v778 = vpop.permute.xlu0 %777
    %779 = vrot.lane.b32.xlu0 %v644, 1
    %v780 = vpop.permute.xlu0 %779
    %v781 = vsel %vm201, %v778, %v780
    %v782 = vsel %vm201, %v776, %v778
    %v783 = vsel %vm201, %v774, %v776
    %v784 = vsel %vm201, %v780, %v774
    %v785 = vld [vmem:[%s206] ss:$8 sm:$0xf]
    %v787 = vlaneseq
    %v788 = vshrl.u32 %v787, 7
    %v789 = vsub.s32 0, %v788
    %v790 = vrot.slane %v785, %v789
    %v791 = vlaneseq
    %v792 = vshrl.u32 %v791, 7
    %v793 = vsub.s32 1, %v792
    %v794 = vrot.slane %v785, %v793
    %v795 = vlaneseq
    %v796 = vshrl.u32 %v795, 7
    %v797 = vsub.s32 2, %v796
    %v798 = vrot.slane %v785, %v797
    %v799 = vlaneseq
    %v800 = vshrl.u32 %v799, 7
    %v801 = vsub.s32 3, %v800
    %v802 = vrot.slane %v785, %v801
    %v807 = vmul.f32 %v784, %v790
    %v808 = vmul.f32 %v783, %v794
    %v809 = vmul.f32 %v782, %v798
    %v810 = vmul.f32 %v781, %v802
    %811 = vst [vmem:[#allocation2 + $0x60] sm:$0xff] %v807
    %812 = vst [vmem:[#allocation2 + $0x68] sm:$0xff] %v808
    %813 = vst [vmem:[#allocation2 + $0x70] sm:$0xff] %v809
    %814 = vst [vmem:[#allocation2 + $0x78] sm:$0xff] %v810
    %815 = vst [vmem:[#allocation2 + $0x80] sm:$0xff] %v641
    %816 = vst [vmem:[#allocation2 + $0x88] sm:$0xff] %v642
    %817 = vst [vmem:[#allocation2 + $0x90] sm:$0xff] %v643
    %818 = vst [vmem:[#allocation2 + $0x98] sm:$0xff] %v644
    %819 = vrot.lane.b32.xlu0 %v641, 127
    %v820 = vpop.permute.xlu0 %819
    %821 = vrot.lane.b32.xlu0 %v642, 127
    %v822 = vpop.permute.xlu0 %821
    %823 = vrot.lane.b32.xlu0 %v643, 127
    %v824 = vpop.permute.xlu0 %823
    %825 = vrot.lane.b32.xlu0 %v644, 127
    %v826 = vpop.permute.xlu0 %825
    %v827 = vsel %vm249, %v824, %v826
    %v828 = vsel %vm249, %v822, %v824
    %v829 = vsel %vm249, %v820, %v822
    %v830 = vsel %vm249, %v826, %v820
    %v831 = vld [vmem:[%s254] ss:$8 sm:$0xf]
    %v833 = vlaneseq
    %v834 = vshrl.u32 %v833, 7
    %v835 = vsub.s32 0, %v834
    %v836 = vrot.slane %v831, %v835
    %v837 = vlaneseq
    %v838 = vshrl.u32 %v837, 7
    %v839 = vsub.s32 1, %v838
    %v840 = vrot.slane %v831, %v839
    %v841 = vlaneseq
    %v842 = vshrl.u32 %v841, 7
    %v843 = vsub.s32 2, %v842
    %v844 = vrot.slane %v831, %v843
    %v845 = vlaneseq
    %v846 = vshrl.u32 %v845, 7
    %v847 = vsub.s32 3, %v846
    %v848 = vrot.slane %v831, %v847
    %v853 = vmul.f32 %v829, %v836
    %v854 = vmul.f32 %v828, %v840
    %v855 = vmul.f32 %v827, %v844
    %v856 = vmul.f32 %v830, %v848
    %857 = vst [vmem:[#allocation2 + $0xa0] sm:$0xff] %v853
    %858 = vst [vmem:[#allocation2 + $0xa8] sm:$0xff] %v854
    %859 = vst [vmem:[#allocation2 + $0xb0] sm:$0xff] %v855
    %860 = vst [vmem:[#allocation2 + $0xb8] sm:$0xff] %v856
    %861 = vrot.lane.b32.xlu0 %v641, 113
    %v862 = vpop.permute.xlu0 %861
    %863 = vrot.lane.b32.xlu0 %v642, 113
    %v864 = vpop.permute.xlu0 %863
    %865 = vrot.lane.b32.xlu0 %v643, 113
    %v866 = vpop.permute.xlu0 %865
    %867 = vrot.lane.b32.xlu0 %v644, 113
    %v868 = vpop.permute.xlu0 %867
    %v869 = vsel %vm293, %v866, %v868
    %v870 = vsel %vm293, %v864, %v866
    %v871 = vsel %vm293, %v862, %v864
    %v872 = vsel %vm293, %v868, %v862
    %v873 = vld [vmem:[%s298] ss:$8 sm:$0xf]
    %v875 = vlaneseq
    %v876 = vshrl.u32 %v875, 7
    %v877 = vsub.s32 0, %v876
    %v878 = vrot.slane %v873, %v877
    %v879 = vlaneseq
    %v880 = vshrl.u32 %v879, 7
    %v881 = vsub.s32 1, %v880
    %v882 = vrot.slane %v873, %v881
    %v883 = vlaneseq
    %v884 = vshrl.u32 %v883, 7
    %v885 = vsub.s32 2, %v884
    %v886 = vrot.slane %v873, %v885
    %v887 = vlaneseq
    %v888 = vshrl.u32 %v887, 7
    %v889 = vsub.s32 3, %v888
    %v890 = vrot.slane %v873, %v889
    %v895 = vmul.f32 %v871, %v878
    %v896 = vmul.f32 %v870, %v882
    %v897 = vmul.f32 %v869, %v886
    %v898 = vmul.f32 %v872, %v890
    %899 = vst [vmem:[#allocation2 + $0xc0] sm:$0xff] %v895
    %900 = vst [vmem:[#allocation2 + $0xc8] sm:$0xff] %v896
    %901 = vst [vmem:[#allocation2 + $0xd0] sm:$0xff] %v897
    %902 = vst [vmem:[#allocation2 + $0xd8] sm:$0xff] %v898
    %903 = vrot.lane.b32.xlu0 %v641, 112
    %v904 = vpop.permute.xlu0 %903
    %905 = vrot.lane.b32.xlu0 %v642, 112
    %v906 = vpop.permute.xlu0 %905
    %907 = vrot.lane.b32.xlu0 %v643, 112
    %v908 = vpop.permute.xlu0 %907
    %909 = vrot.lane.b32.xlu0 %v644, 112
    %v910 = vpop.permute.xlu0 %909
    %v911 = vsel %vm337, %v908, %v910
    %v912 = vsel %vm337, %v906, %v908
    %v913 = vsel %vm337, %v904, %v906
    %v914 = vsel %vm337, %v910, %v904
    %v915 = vld [vmem:[%s342] ss:$8 sm:$0xf]
    %v917 = vlaneseq
    %v918 = vshrl.u32 %v917, 7
    %v919 = vsub.s32 0, %v918
    %v920 = vrot.slane %v915, %v919
    %v921 = vlaneseq
    %v922 = vshrl.u32 %v921, 7
    %v923 = vsub.s32 1, %v922
    %v924 = vrot.slane %v915, %v923
    %v925 = vlaneseq
    %v926 = vshrl.u32 %v925, 7
    %v927 = vsub.s32 2, %v926
    %v928 = vrot.slane %v915, %v927
    %v929 = vlaneseq
    %v930 = vshrl.u32 %v929, 7
    %v931 = vsub.s32 3, %v930
    %v932 = vrot.slane %v915, %v931
    %v937 = vmul.f32 %v913, %v920
    %v938 = vmul.f32 %v912, %v924
    %v939 = vmul.f32 %v911, %v928
    %v940 = vmul.f32 %v914, %v932
    %941 = vst [vmem:[#allocation2 + $0xe0] sm:$0xff] %v937
    %942 = vst [vmem:[#allocation2 + $0xe8] sm:$0xff] %v938
    %943 = vst [vmem:[#allocation2 + $0xf0] sm:$0xff] %v939
    %944 = vst [vmem:[#allocation2 + $0xf8] sm:$0xff] %v940
    %945 = vrot.lane.b32.xlu0 %v641, 111
    %v946 = vpop.permute.xlu0 %945
    %947 = vrot.lane.b32.xlu0 %v642, 111
    %v948 = vpop.permute.xlu0 %947
    %949 = vrot.lane.b32.xlu0 %v643, 111
    %v950 = vpop.permute.xlu0 %949
    %951 = vrot.lane.b32.xlu0 %v644, 111
    %v952 = vpop.permute.xlu0 %951
    %v953 = vsel %vm381, %v950, %v952
    %v954 = vsel %vm381, %v948, %v950
    %v955 = vsel %vm381, %v946, %v948
    %v956 = vsel %vm381, %v952, %v946
    %v957 = vld [vmem:[%s386] ss:$8 sm:$0xf]
    %v959 = vlaneseq
    %v960 = vshrl.u32 %v959, 7
    %v961 = vsub.s32 0, %v960
    %v962 = vrot.slane %v957, %v961
    %v963 = vlaneseq
    %v964 = vshrl.u32 %v963, 7
    %v965 = vsub.s32 1, %v964
    %v966 = vrot.slane %v957, %v965
    %v967 = vlaneseq
    %v968 = vshrl.u32 %v967, 7
    %v969 = vsub.s32 2, %v968
    %v970 = vrot.slane %v957, %v969
    %v971 = vlaneseq
    %v972 = vshrl.u32 %v971, 7
    %v973 = vsub.s32 3, %v972
    %v974 = vrot.slane %v957, %v973
    %v979 = vmul.f32 %v955, %v962
    %v980 = vmul.f32 %v954, %v966
    %v981 = vmul.f32 %v953, %v970
    %v982 = vmul.f32 %v956, %v974
    %983 = vst [vmem:[#allocation2 + $0x100] sm:$0xff] %v979
    %984 = vst [vmem:[#allocation2 + $0x108] sm:$0xff] %v980
    %985 = vst [vmem:[#allocation2 + $0x110] sm:$0xff] %v981
    %986 = vst [vmem:[#allocation2 + $0x118] sm:$0xff] %v982
    %v987 = vld [vmem:[#allocation2] sm:$0xff]
    %v988 = vld [vmem:[#allocation2 + $0x8] sm:$0xff]
    %v989 = vld [vmem:[#allocation2 + $0x10] sm:$0xff]
    %v990 = vld [vmem:[#allocation2 + $0x18] sm:$0xff]
    %v991 = vld [vmem:[#allocation2 + $0x20] sm:$0xff]
    %v992 = vld [vmem:[#allocation2 + $0x28] sm:$0xff]
    %v993 = vld [vmem:[#allocation2 + $0x30] sm:$0xff]
    %v994 = vld [vmem:[#allocation2 + $0x38] sm:$0xff]
    %v995 = vld [vmem:[#allocation2 + $0x40] sm:$0xff]
    %v996 = vld [vmem:[#allocation2 + $0x48] sm:$0xff]
    %v997 = vld [vmem:[#allocation2 + $0x50] sm:$0xff]
    %v998 = vld [vmem:[#allocation2 + $0x58] sm:$0xff]
    %v999 = vld [vmem:[#allocation2 + $0x60] sm:$0xff]
    %v1000 = vld [vmem:[#allocation2 + $0x68] sm:$0xff]
    %v1001 = vld [vmem:[#allocation2 + $0x70] sm:$0xff]
    %v1002 = vld [vmem:[#allocation2 + $0x78] sm:$0xff]
    %v1003 = vld [vmem:[#allocation2 + $0x80] sm:$0xff]
    %v1004 = vld [vmem:[#allocation2 + $0x88] sm:$0xff]
    %v1005 = vld [vmem:[#allocation2 + $0x90] sm:$0xff]
    %v1006 = vld [vmem:[#allocation2 + $0x98] sm:$0xff]
    %v1007 = vld [vmem:[#allocation2 + $0xa0] sm:$0xff]
    %v1008 = vld [vmem:[#allocation2 + $0xa8] sm:$0xff]
    %v1009 = vld [vmem:[#allocation2 + $0xb0] sm:$0xff]
    %v1010 = vld [vmem:[#allocation2 + $0xb8] sm:$0xff]
    %v1011 = vld [vmem:[#allocation2 + $0xc0] sm:$0xff]
    %v1012 = vld [vmem:[#allocation2 + $0xc8] sm:$0xff]
    %v1013 = vld [vmem:[#allocation2 + $0xd0] sm:$0xff]
    %v1014 = vld [vmem:[#allocation2 + $0xd8] sm:$0xff]
    %v1015 = vld [vmem:[#allocation2 + $0xe0] sm:$0xff]
    %v1016 = vld [vmem:[#allocation2 + $0xe8] sm:$0xff]
    %v1017 = vld [vmem:[#allocation2 + $0xf0] sm:$0xff]
    %v1018 = vld [vmem:[#allocation2 + $0xf8] sm:$0xff]
    %v1019 = vld [vmem:[#allocation2 + $0x100] sm:$0xff]
    %v1020 = vld [vmem:[#allocation2 + $0x108] sm:$0xff]
    %v1021 = vld [vmem:[#allocation2 + $0x110] sm:$0xff]
    %v1022 = vld [vmem:[#allocation2 + $0x118] sm:$0xff]
    %v1024 = vsel %vm453, %v646, 0
    %1026 = vmatprep.subr.mxu0 %v988
    %1027 = vmatpush1.msra.mxu0 %v987
    %1028 = vmatprep.subr.mxu0 %v992
    %1029 = vmatpush1.msra.mxu0 %v991
    %1030 = vmatprep.subr.mxu0 %v996
    %1031 = vmatpush1.msra.mxu0 %v995
    %1032 = vmatprep.subr.mxu0 %v1000
    %1033 = vmatpush1.msra.mxu0 %v999
    %1034 = vmatprep.subr.mxu0 %v1004
    %1035 = vmatpush1.msra.mxu0 %v1003
    %1036 = vmatprep.subr.mxu0 %v1008
    %1037 = vmatpush1.msra.mxu0 %v1007
    %1038 = vmatprep.subr.mxu0 %v1012
    %1039 = vmatpush1.msra.mxu0 %v1011
    %1040 = vmatprep.subr.mxu0 %v1016
    %1041 = vmatpush1.msra.mxu0 %v1015
    %1042 = vmatprep.subr.mxu0 %v1020
    %1043 = vmatpush1.msra.mxu0 %v1019
    %1044 = vmatprep.subr.mxu0 0.0
    %1045 = vmatpush1.msra.mxu0 0.0
    %1046 = vmatprep.subr.mxu0 0.0
    %1047 = vmatpush1.msra.mxu0 0.0
    %1048 = vmatprep.subr.mxu0 0.0
    %1049 = vmatpush1.msra.mxu0 0.0
    %1050 = vmatprep.subr.mxu0 0.0
    %1051 = vmatpush1.msra.mxu0 0.0
    %1052 = vmatprep.subr.mxu0 0.0
    %1053 = vmatpush1.msra.mxu0 0.0
    %1054 = vmatprep.subr.mxu0 0.0
    %1055 = vmatpush1.msra.mxu0 0.0
    %1056 = vmatprep.subr.mxu0 0.0
    %1057 = vmatpush1.msra.mxu0 0.0
    %1058 = vmatprep.subr.mxu0 0.0
    %1059 = vmatpush1.msra.mxu0 0.0
    %1060 = vmatprep.subr.mxu0 0.0
    %1061 = vmatpush1.msra.mxu0 0.0
    %1062 = vmatprep.subr.mxu0 0.0
    %1063 = vmatpush1.msra.mxu0 0.0
    %1064 = vmatprep.subr.mxu0 0.0
    %1065 = vmatpush1.msra.mxu0 0.0
    %1066 = vmatprep.subr.mxu0 0.0
    %1067 = vmatpush1.msra.mxu0 0.0
    %1068 = vmatprep.subr.mxu0 0.0
    %1069 = vmatpush1.msra.mxu0 0.0
    %1070 = vmatprep.subr.mxu0 0.0
    %1071 = vmatpush1.msra.mxu0 0.0
    %1072 = vmatprep.subr.mxu0 0.0
    %1073 = vmatpush1.msra.mxu0 0.0
    %1074 = vmatprep.subr.mxu0 0.0
    %1075 = vmatpush1.msra.mxu0 0.0
    %1076 = vmatprep.subr.mxu0 0.0
    %1077 = vmatpush1.msra.mxu0 0.0
    %1078 = vmatprep.subr.mxu0 0.0
    %1079 = vmatpush1.msra.mxu0 0.0
    %1080 = vmatprep.subr.mxu0 0.0
    %1081 = vmatpush1.msra.mxu0 0.0
    %1082 = vmatprep.subr.mxu0 0.0
    %1083 = vmatpush1.msra.mxu0 0.0
    %1084 = vmatprep.subr.mxu0 0.0
    %1085 = vmatpush1.msra.mxu0 0.0
    %1086 = vmatprep.subr.mxu0 0.0
    %1087 = vmatpush1.msra.mxu0 0.0
    %1088 = vmatprep.subr.mxu0 0.0
    %1089 = vmatpush1.msra.mxu0 0.0
    %1090 = vmatprep.mubr.f32.mxu0 0.0
    %1091 = vmatmul.mubr.f32.gmra.mrb[0].mxu0 %v1024
    %v1092 = vpop.f32.mrb[0].mxu0
    %v1093 = vadd.f32 0.0, %v1092
    %v1094 = vpop.f32.mrb[0].mxu0
    %v1095 = vadd.f32 0.0, %v1094
    %1096 = vdwg.mxu0
    %1097 = vmatprep.subr.mxu0 %v990
    %1098 = vmatpush1.msra.mxu0 %v989
    %1099 = vmatprep.subr.mxu0 %v994
    %1100 = vmatpush1.msra.mxu0 %v993
    %1101 = vmatprep.subr.mxu0 %v998
    %1102 = vmatpush1.msra.mxu0 %v997
    %1103 = vmatprep.subr.mxu0 %v1002
    %1104 = vmatpush1.msra.mxu0 %v1001
    %1105 = vmatprep.subr.mxu0 %v1006
    %1106 = vmatpush1.msra.mxu0 %v1005
    %1107 = vmatprep.subr.mxu0 %v1010
    %1108 = vmatpush1.msra.mxu0 %v1009
    %1109 = vmatprep.subr.mxu0 %v1014
    %1110 = vmatpush1.msra.mxu0 %v1013
    %1111 = vmatprep.subr.mxu0 %v1018
    %1112 = vmatpush1.msra.mxu0 %v1017
    %1113 = vmatprep.subr.mxu0 %v1022
    %1114 = vmatpush1.msra.mxu0 %v1021
    %1115 = vmatprep.subr.mxu0 0.0
    %1116 = vmatpush1.msra.mxu0 0.0
    %1117 = vmatprep.subr.mxu0 0.0
    %1118 = vmatpush1.msra.mxu0 0.0
    %1119 = vmatprep.subr.mxu0 0.0
    %1120 = vmatpush1.msra.mxu0 0.0
    %1121 = vmatprep.subr.mxu0 0.0
    %1122 = vmatpush1.msra.mxu0 0.0
    %1123 = vmatprep.subr.mxu0 0.0
    %1124 = vmatpush1.msra.mxu0 0.0
    %1125 = vmatprep.subr.mxu0 0.0
    %1126 = vmatpush1.msra.mxu0 0.0
    %1127 = vmatprep.subr.mxu0 0.0
    %1128 = vmatpush1.msra.mxu0 0.0
    %1129 = vmatprep.subr.mxu0 0.0
    %1130 = vmatpush1.msra.mxu0 0.0
    %1131 = vmatprep.subr.mxu0 0.0
    %1132 = vmatpush1.msra.mxu0 0.0
    %1133 = vmatprep.subr.mxu0 0.0
    %1134 = vmatpush1.msra.mxu0 0.0
    %1135 = vmatprep.subr.mxu0 0.0
    %1136 = vmatpush1.msra.mxu0 0.0
    %1137 = vmatprep.subr.mxu0 0.0
    %1138 = vmatpush1.msra.mxu0 0.0
    %1139 = vmatprep.subr.mxu0 0.0
    %1140 = vmatpush1.msra.mxu0 0.0
    %1141 = vmatprep.subr.mxu0 0.0
    %1142 = vmatpush1.msra.mxu0 0.0
    %1143 = vmatprep.subr.mxu0 0.0
    %1144 = vmatpush1.msra.mxu0 0.0
    %1145 = vmatprep.subr.mxu0 0.0
    %1146 = vmatpush1.msra.mxu0 0.0
    %1147 = vmatprep.subr.mxu0 0.0
    %1148 = vmatpush1.msra.mxu0 0.0
    %1149 = vmatprep.subr.mxu0 0.0
    %1150 = vmatpush1.msra.mxu0 0.0
    %1151 = vmatprep.subr.mxu0 0.0
    %1152 = vmatpush1.msra.mxu0 0.0
    %1153 = vmatprep.subr.mxu0 0.0
    %1154 = vmatpush1.msra.mxu0 0.0
    %1155 = vmatprep.subr.mxu0 0.0
    %1156 = vmatpush1.msra.mxu0 0.0
    %1157 = vmatprep.subr.mxu0 0.0
    %1158 = vmatpush1.msra.mxu0 0.0
    %1159 = vmatprep.subr.mxu0 0.0
    %1160 = vmatpush1.msra.mxu0 0.0
    %1161 = vmatprep.mubr.f32.mxu0 0.0
    %1162 = vmatmul.mubr.f32.gmra.mrb[0].mxu0 %v1024
    %v1163 = vpop.f32.mrb[0].mxu0
    %v1164 = vadd.f32 0.0, %v1163
    %v1165 = vpop.f32.mrb[0].mxu0
    %v1166 = vadd.f32 0.0, %v1165
    %1167 = vdwg.mxu0
    %v1168 = vld [vmem:[%s2] sm:$0xff]
    %v1169 = vadd.f32 %v1093, %v1095
    %v1170 = vadd.f32 %v1169, %v1164
    %v1171 = vadd.f32 %v1170, %v1166
    %1172 = vadd.xlane.f32.xlu0 %v1171
    %v1173 = vpop.xlane.xlu0 %1172
    %v1174 = vmul.f32 %v1173, 0.001953125
    %v1175 = vsub.f32 %v1093, %v1174
    %v1176 = vsub.f32 %v1095, %v1174
    %v1177 = vsub.f32 %v1164, %v1174
    %v1178 = vsub.f32 %v1166, %v1174
    %v1179 = vmul.f32 %v1175, %v1175
    %v1180 = vmul.f32 %v1176, %v1176
    %v1181 = vmul.f32 %v1177, %v1177
    %v1182 = vmul.f32 %v1178, %v1178
    %v1183 = vadd.f32 %v1179, %v1180
    %v1184 = vadd.f32 %v1183, %v1181
    %v1185 = vadd.f32 %v1184, %v1182
    %1186 = vadd.xlane.f32.xlu0 %v1185
    %v1187 = vpop.xlane.xlu0 %1186
    %v1188 = vmul.f32 %v1187, 0.001953125
    %v1189 = vadd.f32 %v1188, 1e-05
    %v1190 = vrsqrt.pop %v1189
    %v1191 = vmul.f32 %v1168, %v1190
    %1193 = vset.pattern.permute.xlu0 2
    %1194 = vperm.xlu0 %1193, %v1191
    %v1195 = vpop.permute.xlu0 %1194
    %v1197 = vmul.f32 %v1175, %v1195
    %v1198 = vmul.f32 %v1176, %v1195
    %v1199 = vmul.f32 %v1177, %v1195
    %v1200 = vmul.f32 %v1178, %v1195
    %1202 = vset.pattern.permute.xlu0 3
    %1203 = vperm.xlu0 %1202, %v1168
    %v1204 = vpop.permute.xlu0 %1203
    %v1206 = vadd.f32 %v1197, %v1204
    %v1207 = vadd.f32 %v1198, %v1204
    %v1208 = vadd.f32 %v1199, %v1204
    %v1209 = vadd.f32 %v1200, %v1204
    %v1210 = vld [vmem:[#allocation3] sm:$0xff]
    %v1211 = vld [vmem:[#allocation3 + $0x8] sm:$0xff]
    %v1212 = vld [vmem:[#allocation3 + $0x10] sm:$0xff]
    %v1213 = vld [vmem:[#allocation3 + $0x18] sm:$0xff]
    %v1214 = vadd.f32 %v1206, %v1210
    %v1215 = vadd.f32 %v1207, %v1211
    %v1216 = vadd.f32 %v1208, %v1212
    %v1217 = vadd.f32 %v1209, %v1213
    %1218 = vst [vmem:[#allocation9] sm:$0xff] %v1214
    %1219 = vst [vmem:[#allocation9 + $0x8] sm:$0xff] %v1215
    %1220 = vst [vmem:[#allocation9 + $0x10] sm:$0xff] %v1216
    %1221 = vst [vmem:[#allocation9 + $0x18] sm:$0xff] %v1217
    // Predicated region
    $region30: #{tpu_custom_call.1} parent=1 // pred_check
      _
    $region31: #{tpu_custom_call.1} parent=1 // pred_check_branch
      %1223 = sbr.rel (0) target = $region33
    $region32: #{tpu_custom_call.1} parent=1 // pred_region
      %s1225 = ssub.s32 512, 512
      %1226 = vsyncadd [#allocation5], %s1225
      %s1228 = sshll.u32 [#allocation9], 4
      %s1229 = int_to_ptr.vmem [resolvable:$true] %s1228
      %1231 = dma.vmem_to_hbm [thread:$0]  %s1229, 512, %s4, [#allocation5]
    $region33: #{tpu_custom_call.1} parent=1 // pred_fallthru
      _
    // Predicated region
    $region34: #{tpu_custom_call.1} parent=1 // pred_check
      _
    $region35: #{tpu_custom_call.1} parent=1 // pred_check_branch
      %1233 = sbr.rel (0) target = $region37
    $region36: #{tpu_custom_call.1} parent=1 // pred_region
      %1234 = dma.done [#allocation5], 512
    $region37: #{tpu_custom_call.1} parent=1 // pred_fallthru
      _
    %1235 = vsyncpa [#allocation4], 1
    %1236 = vsyncpa [#allocation7], 1
    %1237 = vsyncpa [#allocation5], 1

</llo_original>
